<compile_context>
chip_gen: v5e
topology: v5e:2x2
jax: 0.10.0
libtpu: 0.0.40
codegen_flags: <defaults>
</compile_context>

<pallas_src>
import math
import functools

import jax
import jax.numpy as jnp
from jax import lax
from jax.experimental import pallas as pl
from jax.experimental.pallas import tpu as pltpu


def _encoder_layer_kernel(
    x_ref,
    wq_ref, bq_ref, wk_ref, bk_ref, wv_ref, bv_ref, wo_ref, bo_ref,
    g1_ref, be1_ref,
    w1_ref, b1_ref, w2_ref, b2_ref,
    g2_ref, be2_ref,
    o_ref,
    *, heads, eps, mxu_dtype,
):
    # One grid step handles one batch element; leading batch dim is Squeezed away.
    x = x_ref[...]                    # (S, D) float32
    S, D = x.shape
    d_k = D // heads
    scale = 1.0 / math.sqrt(d_k)

    def linear(v, w_ref, b_ref):
        # MXU matmul in low precision, f32 accumulation; bias add stays f32.
        return (jnp.dot(v.astype(mxu_dtype), w_ref[...],
                        preferred_element_type=jnp.float32)
                + b_ref[...])         # bias is (1, F) -> broadcasts over rows

    def layer_norm(v, g_ref, b_ref):
        mu = jnp.mean(v, axis=-1, keepdims=True)
        c = v - mu
        var = jnp.mean(c * c, axis=-1, keepdims=True)
        return c * lax.rsqrt(var + eps) * g_ref[...] + b_ref[...]

    # ---- multi-head self-attention (head-batched, mask=None path) ----
    q = linear(x, wq_ref, bq_ref)     # (S, D) f32
    k = linear(x, wk_ref, bk_ref)
    v = linear(x, wv_ref, bv_ref)

    def heads_first(t):               # (S, D) -> (H, S, d_k), cast for MXU
        return t.reshape(S, heads, d_k).swapaxes(0, 1).astype(mxu_dtype)

    qh, kh, vh = heads_first(q), heads_first(k), heads_first(v)

    s = jnp.einsum("hqd,hkd->hqk", qh, kh,
                   preferred_element_type=jnp.float32) * scale   # (H, S, S) f32
    s = s - jnp.max(s, axis=-1, keepdims=True)
    p = jnp.exp(s)
    p = p * pl.reciprocal(jnp.sum(p, axis=-1, keepdims=True), approx=True)
    o = jnp.einsum("hqk,hkd->hqd", p.astype(mxu_dtype), vh,
                   preferred_element_type=jnp.float32)            # (H, S, d_k) f32
    concat = o.swapaxes(0, 1).reshape(S, D)                       # == per-head concat

    attn = linear(concat, wo_ref, bo_ref)                         # output projection

    # dropout_1 -> identity (inference); fused residual + LayerNorm 1
    z1 = attn + x
    y = layer_norm(z1, g1_ref, be1_ref)

    # ---- position-wise FFN: Linear -> ReLU -> Linear ----
    h1 = jnp.maximum(linear(y, w1_ref, b1_ref), 0.0)              # (S, d_ff)
    h2 = linear(h1, w2_ref, b2_ref)                               # (S, D)

    # dropout_2 -> identity (inference); fused residual + LayerNorm 2
    z2 = h2 + y
    o_ref[...] = layer_norm(z2, g2_ref, be2_ref).astype(o_ref.dtype)


def _vmem_budget_bytes(S, D, d_ff, heads):
    """Rough VMEM footprint (bytes) with headroom; clamped to sane per-chip limits."""
    f32, bf16 = 4, 2
    weights = (4 * D * D + 2 * D * d_ff) * bf16          # bf16-resident matmul weights
    small = (10 * D + d_ff) * f32                         # biases + LN params
    acts = (8 * S * D + heads * S * S + 2 * S * d_ff) * f32
    total = 2 * (weights + small) + 3 * acts + (1 << 20)  # double-buffer + headroom
    return int(min(max(total, 16 * 1024 * 1024), 64 * 1024 * 1024))


def encoder_layer_pallas(x, params, heads, eps=1e-5, mxu_dtype=jnp.bfloat16):
    """x: (B, S, D) float32; params: dict of weights (see init_params)."""
    B, S, D = x.shape
    assert D % heads == 0, "d_model must be divisible by heads"
    d_ff = params["w1"].shape[1]

    # Cast matmul weights to bf16 at the call boundary (halves VMEM + DMA bytes).
    # NOTE: their index_map is constant, so a single buffer would suffice
    # (pipeline_mode=pl.Buffered(1)); left at the default for maximum portability.
    wq = params["wq"].astype(mxu_dtype)
    wk = params["wk"].astype(mxu_dtype)
    wv = params["wv"].astype(mxu_dtype)
    wo = params["wo"].astype(mxu_dtype)
    w1 = params["w1"].astype(mxu_dtype)
    w2 = params["w2"].astype(mxu_dtype)

    def rep(shape):  # whole-array block, replicated across the batch grid
        return pl.BlockSpec(shape, lambda b: tuple(0 for _ in shape))

    in_specs = [
        pl.BlockSpec((pl.Squeezed(), S, D), lambda b: (b, 0, 0)),  # x: one batch elem/step
        rep((D, D)), rep((1, D)),                                  # wq, bq
        rep((D, D)), rep((1, D)),                                  # wk, bk
        rep((D, D)), rep((1, D)),                                  # wv, bv
        rep((D, D)), rep((1, D)),                                  # wo, bo
        rep((1, D)), rep((1, D)),                                  # ln1 gamma, beta
        rep((D, d_ff)), rep((1, d_ff)),                            # ffn w1, b1
        rep((d_ff, D)), rep((1, D)),                               # ffn w2, b2
        rep((1, D)), rep((1, D)),                                  # ln2 gamma, beta
    ]

    kernel = functools.partial(_encoder_layer_kernel,
                               heads=heads, eps=eps, mxu_dtype=mxu_dtype)
    return pl.pallas_call(
        kernel,
        out_shape=jax.ShapeDtypeStruct((B, S, D), x.dtype),
        grid_spec=pltpu.PrefetchScalarGridSpec(
            num_scalar_prefetch=0,
            grid=(B,),
            in_specs=in_specs,
            out_specs=pl.BlockSpec((pl.Squeezed(), S, D), lambda b: (b, 0, 0)),
        ),
        compiler_params=pltpu.CompilerParams(
            dimension_semantics=("parallel",),
            vmem_limit_bytes=_vmem_budget_bytes(S, D, d_ff, heads),
        ),
    )(
        x,
        wq, params["bq"], wk, params["bk"],
        wv, params["bv"], wo, params["bo"],
        params["g1"], params["be1"],
        w1, params["b1"], w2, params["b2"],
        params["g2"], params["be2"],
    )


def encoder_layer_ref(x, params, heads, eps=1e-5):
    """Pure-JAX f32 reference mirroring the PyTorch forward (dropout = identity)."""
    B, S, D = x.shape
    d_k = D // heads

    def lin(v, w, b):
        return v @ w + b[0]

    def ln(v, g, b):
        mu = v.mean(-1, keepdims=True)
        var = ((v - mu) ** 2).mean(-1, keepdims=True)
        return (v - mu) / jnp.sqrt(var + eps) * g[0] + b[0]

    q = lin(x, params["wq"], params["bq"]).reshape(B, S, heads, d_k).transpose(0, 2, 1, 3)
    k = lin(x, params["wk"], params["bk"]).reshape(B, S, heads, d_k).transpose(0, 2, 1, 3)
    v = lin(x, params["wv"], params["bv"]).reshape(B, S, heads, d_k).transpose(0, 2, 1, 3)
    s = jnp.einsum("bhqd,bhkd->bhqk", q, k) / math.sqrt(d_k)
    p = jax.nn.softmax(s, axis=-1)
    o = jnp.einsum("bhqk,bhkd->bhqd", p, v).transpose(0, 2, 1, 3).reshape(B, S, D)
    attn = lin(o, params["wo"], params["bo"])
    y = ln(attn + x, params["g1"], params["be1"])
    h = jnp.maximum(lin(y, params["w1"], params["b1"]), 0.0)
    ff = lin(h, params["w2"], params["b2"])
    return ln(ff + y, params["g2"], params["be2"])


def init_params(key, d_model, d_ff):
    ks = jax.random.split(key, 8)
    std = 0.02
    return {
        "wq": jax.random.normal(ks[0], (d_model, d_model), jnp.float32) * std,
        "wk": jax.random.normal(ks[1], (d_model, d_model), jnp.float32) * std,
        "wv": jax.random.normal(ks[2], (d_model, d_model), jnp.float32) * std,
        "wo": jax.random.normal(ks[3], (d_model, d_model), jnp.float32) * std,
        "bq": jax.random.normal(ks[4], (1, d_model), jnp.float32) * std,
        "bk": jnp.zeros((1, d_model), jnp.float32),
        "bv": jnp.zeros((1, d_model), jnp.float32),
        "bo": jnp.zeros((1, d_model), jnp.float32),
        "w1": jax.random.normal(ks[5], (d_model, d_ff), jnp.float32) * std,
        "b1": jnp.zeros((1, d_ff), jnp.float32),
        "w2": jax.random.normal(ks[6], (d_ff, d_model), jnp.float32) * std,
        "b2": jnp.zeros((1, d_model), jnp.float32),
        "g1": jnp.ones((1, d_model), jnp.float32),
        "be1": jnp.zeros((1, d_model), jnp.float32),
        "g2": jnp.ones((1, d_model), jnp.float32),
        "be2": jnp.zeros((1, d_model), jnp.float32),
    }


if __name__ == "__main__":
    # Small shapes consistent with the module: batch=2, seq=8, d_model=32, heads=4, d_ff=64
    B, S, D, H, DFF = 2, 8, 32, 4, 64
    key = jax.random.PRNGKey(0)
    kx, kp = jax.random.split(key)
    x = jax.random.normal(kx, (B, S, D), jnp.float32)
    params = init_params(kp, D, DFF)

    out = encoder_layer_pallas(x, params, heads=H)
    out = jax.block_until_ready(out)

    ref = encoder_layer_ref(x, params, heads=H)
    assert out.shape == (B, S, D)
    # bf16 MXU inputs (f32 accumulation) -> compare against f32 reference with a
    # correspondingly relaxed tolerance.
    assert jnp.allclose(out, ref, rtol=1e-2, atol=1e-2), "mismatch vs reference"
    print("KERNEL_OK")
</pallas_src>

<mosaic_0001>
module attributes {stable_mosaic.version = 11 : i64} {
  func.func @_encoder_layer_kernel(%arg0: i32, %arg1: memref<1x8x32xf32, #tpu.memory_space<vmem>>, %arg2: memref<32x32xbf16, #tpu.memory_space<vmem>>, %arg3: memref<1x32xf32, #tpu.memory_space<vmem>>, %arg4: memref<32x32xbf16, #tpu.memory_space<vmem>>, %arg5: memref<1x32xf32, #tpu.memory_space<vmem>>, %arg6: memref<32x32xbf16, #tpu.memory_space<vmem>>, %arg7: memref<1x32xf32, #tpu.memory_space<vmem>>, %arg8: memref<32x32xbf16, #tpu.memory_space<vmem>>, %arg9: memref<1x32xf32, #tpu.memory_space<vmem>>, %arg10: memref<1x32xf32, #tpu.memory_space<vmem>>, %arg11: memref<1x32xf32, #tpu.memory_space<vmem>>, %arg12: memref<32x64xbf16, #tpu.memory_space<vmem>>, %arg13: memref<1x64xf32, #tpu.memory_space<vmem>>, %arg14: memref<64x32xbf16, #tpu.memory_space<vmem>>, %arg15: memref<1x32xf32, #tpu.memory_space<vmem>>, %arg16: memref<1x32xf32, #tpu.memory_space<vmem>>, %arg17: memref<1x32xf32, #tpu.memory_space<vmem>>, %arg18: memref<1x8x32xf32, #tpu.memory_space<vmem>>) attributes {dimension_semantics = [#tpu.dimension_semantics<parallel>], iteration_bounds = array<i64: 2>, scalar_prefetch = 0 : i64, scratch_operands = 0 : i64, tpu.core_type = #tpu.core_type<tc>, window_params = [{transform_indices = @transform_0, window_bounds = array<i64: 1, 8, 32>}, {pipeline_mode = #tpu.pipeline_mode<synchronous>, transform_indices = @transform_1, window_bounds = array<i64: 32, 32>}, {pipeline_mode = #tpu.pipeline_mode<synchronous>, transform_indices = @transform_2, window_bounds = array<i64: 1, 32>}, {pipeline_mode = #tpu.pipeline_mode<synchronous>, transform_indices = @transform_3, window_bounds = array<i64: 32, 32>}, {pipeline_mode = #tpu.pipeline_mode<synchronous>, transform_indices = @transform_4, window_bounds = array<i64: 1, 32>}, {pipeline_mode = #tpu.pipeline_mode<synchronous>, transform_indices = @transform_5, window_bounds = array<i64: 32, 32>}, {pipeline_mode = #tpu.pipeline_mode<synchronous>, transform_indices = @transform_6, window_bounds = array<i64: 1, 32>}, {pipeline_mode = #tpu.pipeline_mode<synchronous>, transform_indices = @transform_7, window_bounds = array<i64: 32, 32>}, {pipeline_mode = #tpu.pipeline_mode<synchronous>, transform_indices = @transform_8, window_bounds = array<i64: 1, 32>}, {pipeline_mode = #tpu.pipeline_mode<synchronous>, transform_indices = @transform_9, window_bounds = array<i64: 1, 32>}, {pipeline_mode = #tpu.pipeline_mode<synchronous>, transform_indices = @transform_10, window_bounds = array<i64: 1, 32>}, {pipeline_mode = #tpu.pipeline_mode<synchronous>, transform_indices = @transform_11, window_bounds = array<i64: 32, 64>}, {pipeline_mode = #tpu.pipeline_mode<synchronous>, transform_indices = @transform_12, window_bounds = array<i64: 1, 64>}, {pipeline_mode = #tpu.pipeline_mode<synchronous>, transform_indices = @transform_13, window_bounds = array<i64: 64, 32>}, {pipeline_mode = #tpu.pipeline_mode<synchronous>, transform_indices = @transform_14, window_bounds = array<i64: 1, 32>}, {pipeline_mode = #tpu.pipeline_mode<synchronous>, transform_indices = @transform_15, window_bounds = array<i64: 1, 32>}, {pipeline_mode = #tpu.pipeline_mode<synchronous>, transform_indices = @transform_16, window_bounds = array<i64: 1, 32>}, {transform_indices = @transform_17, window_bounds = array<i64: 1, 8, 32>}]} {
    %c0 = arith.constant 0 : index
    %c0_0 = arith.constant 0 : index
    %c0_1 = arith.constant 0 : index
    %0 = vector.load %arg1[%c0, %c0_0, %c0_1] : memref<1x8x32xf32, #tpu.memory_space<vmem>>, vector<1x8x32xf32>
    %1 = vector.shape_cast %0 : vector<1x8x32xf32> to vector<8x32xf32>
    %2 = arith.truncf %1 : vector<8x32xf32> to vector<8x32xbf16>
    %c0_2 = arith.constant 0 : index
    %c0_3 = arith.constant 0 : index
    %3 = vector.load %arg2[%c0_2, %c0_3] : memref<32x32xbf16, #tpu.memory_space<vmem>>, vector<32x32xbf16>
    %cst = arith.constant dense<0.000000e+00> : vector<8x32xf32>
    %4 = tpu.matmul %2, %3, %cst {dimension_numbers = #tpu.dot_dimension_numbers<[1], [0], [0], [1], [0, 0, 1, 1], [], []>} : vector<8x32xbf16>, vector<32x32xbf16>, vector<8x32xf32> -> vector<8x32xf32>
    %c0_4 = arith.constant 0 : index
    %c0_5 = arith.constant 0 : index
    %5 = vector.load %arg3[%c0_4, %c0_5] : memref<1x32xf32, #tpu.memory_space<vmem>>, vector<1x32xf32>
    %6 = vector.broadcast %5 : vector<1x32xf32> to vector<8x32xf32>
    %7 = arith.addf %4, %6 : vector<8x32xf32>
    %8 = arith.truncf %1 : vector<8x32xf32> to vector<8x32xbf16>
    %c0_6 = arith.constant 0 : index
    %c0_7 = arith.constant 0 : index
    %9 = vector.load %arg4[%c0_6, %c0_7] : memref<32x32xbf16, #tpu.memory_space<vmem>>, vector<32x32xbf16>
    %cst_8 = arith.constant dense<0.000000e+00> : vector<8x32xf32>
    %10 = tpu.matmul %8, %9, %cst_8 {dimension_numbers = #tpu.dot_dimension_numbers<[1], [0], [0], [1], [0, 0, 1, 1], [], []>} : vector<8x32xbf16>, vector<32x32xbf16>, vector<8x32xf32> -> vector<8x32xf32>
    %c0_9 = arith.constant 0 : index
    %c0_10 = arith.constant 0 : index
    %11 = vector.load %arg5[%c0_9, %c0_10] : memref<1x32xf32, #tpu.memory_space<vmem>>, vector<1x32xf32>
    %12 = vector.broadcast %11 : vector<1x32xf32> to vector<8x32xf32>
    %13 = arith.addf %10, %12 : vector<8x32xf32>
    %14 = arith.truncf %1 : vector<8x32xf32> to vector<8x32xbf16>
    %c0_11 = arith.constant 0 : index
    %c0_12 = arith.constant 0 : index
    %15 = vector.load %arg6[%c0_11, %c0_12] : memref<32x32xbf16, #tpu.memory_space<vmem>>, vector<32x32xbf16>
    %cst_13 = arith.constant dense<0.000000e+00> : vector<8x32xf32>
    %16 = tpu.matmul %14, %15, %cst_13 {dimension_numbers = #tpu.dot_dimension_numbers<[1], [0], [0], [1], [0, 0, 1, 1], [], []>} : vector<8x32xbf16>, vector<32x32xbf16>, vector<8x32xf32> -> vector<8x32xf32>
    %c0_14 = arith.constant 0 : index
    %c0_15 = arith.constant 0 : index
    %17 = vector.load %arg7[%c0_14, %c0_15] : memref<1x32xf32, #tpu.memory_space<vmem>>, vector<1x32xf32>
    %18 = vector.broadcast %17 : vector<1x32xf32> to vector<8x32xf32>
    %19 = arith.addf %16, %18 : vector<8x32xf32>
    %20 = vector.shape_cast %7 : vector<8x32xf32> to vector<8x4x8xf32>
    %21 = tpu.transpose %20, [1, 0, 2] : vector<8x4x8xf32> -> vector<4x8x8xf32>
    %22 = arith.truncf %21 : vector<4x8x8xf32> to vector<4x8x8xbf16>
    %23 = vector.shape_cast %13 : vector<8x32xf32> to vector<8x4x8xf32>
    %24 = tpu.transpose %23, [1, 0, 2] : vector<8x4x8xf32> -> vector<4x8x8xf32>
    %25 = arith.truncf %24 : vector<4x8x8xf32> to vector<4x8x8xbf16>
    %26 = vector.shape_cast %19 : vector<8x32xf32> to vector<8x4x8xf32>
    %27 = tpu.transpose %26, [1, 0, 2] : vector<8x4x8xf32> -> vector<4x8x8xf32>
    %28 = arith.truncf %27 : vector<4x8x8xf32> to vector<4x8x8xbf16>
    "tpu.trace_start"() <{level = 10 : i32, message = "hqd,hkd->hqk"}> : () -> ()
    %cst_16 = arith.constant dense<0.000000e+00> : vector<4x8x8xf32>
    %29 = tpu.matmul %22, %25, %cst_16 {dimension_numbers = #tpu.dot_dimension_numbers<[2], [2], [1], [1], [0, 0, 0, 1, 1, 1], [0], [0]>} : vector<4x8x8xbf16>, vector<4x8x8xbf16>, vector<4x8x8xf32> -> vector<4x8x8xf32>
    "tpu.trace_stop"() : () -> ()
    %cst_17 = arith.constant 0.353553385 : f32
    %30 = vector.broadcast %cst_17 : f32 to vector<4x8x8xf32>
    %31 = arith.mulf %29, %30 : vector<4x8x8xf32>
    %cst_18 = arith.constant dense<0xFF800000> : vector<4x8xf32>
    %32 = vector.multi_reduction <maximumf>, %31, %cst_18 [2] : vector<4x8x8xf32> to vector<4x8xf32>
    %33 = vector.shape_cast %32 : vector<4x8xf32> to vector<4x8x1xf32>
    %34 = vector.broadcast %33 : vector<4x8x1xf32> to vector<4x8x8xf32>
    %35 = arith.subf %31, %34 : vector<4x8x8xf32>
    %36 = math.exp %35 : vector<4x8x8xf32>
    %cst_19 = arith.constant dense<0.000000e+00> : vector<4x8xf32>
    %37 = vector.multi_reduction <add>, %36, %cst_19 [2] : vector<4x8x8xf32> to vector<4x8xf32>
    %38 = vector.shape_cast %37 : vector<4x8xf32> to vector<4x8x1xf32>
    %39 = tpu.reciprocal %38 {approx = true} : vector<4x8x1xf32> -> vector<4x8x1xf32>
    %40 = vector.broadcast %39 : vector<4x8x1xf32> to vector<4x8x8xf32>
    %41 = arith.mulf %36, %40 : vector<4x8x8xf32>
    %42 = arith.truncf %41 : vector<4x8x8xf32> to vector<4x8x8xbf16>
    "tpu.trace_start"() <{level = 10 : i32, message = "hqk,hkd->hqd"}> : () -> ()
    %cst_20 = arith.constant dense<0.000000e+00> : vector<4x8x8xf32>
    %43 = tpu.matmul %42, %28, %cst_20 {dimension_numbers = #tpu.dot_dimension_numbers<[2], [1], [1], [2], [0, 0, 0, 1, 1, 2], [0], [0]>} : vector<4x8x8xbf16>, vector<4x8x8xbf16>, vector<4x8x8xf32> -> vector<4x8x8xf32>
    "tpu.trace_stop"() : () -> ()
    %44 = tpu.transpose %43, [1, 0, 2] : vector<4x8x8xf32> -> vector<8x4x8xf32>
    %45 = vector.shape_cast %44 : vector<8x4x8xf32> to vector<8x32xf32>
    %46 = arith.truncf %45 : vector<8x32xf32> to vector<8x32xbf16>
    %c0_21 = arith.constant 0 : index
    %c0_22 = arith.constant 0 : index
    %47 = vector.load %arg8[%c0_21, %c0_22] : memref<32x32xbf16, #tpu.memory_space<vmem>>, vector<32x32xbf16>
    %cst_23 = arith.constant dense<0.000000e+00> : vector<8x32xf32>
    %48 = tpu.matmul %46, %47, %cst_23 {dimension_numbers = #tpu.dot_dimension_numbers<[1], [0], [0], [1], [0, 0, 1, 1], [], []>} : vector<8x32xbf16>, vector<32x32xbf16>, vector<8x32xf32> -> vector<8x32xf32>
    %c0_24 = arith.constant 0 : index
    %c0_25 = arith.constant 0 : index
    %49 = vector.load %arg9[%c0_24, %c0_25] : memref<1x32xf32, #tpu.memory_space<vmem>>, vector<1x32xf32>
    %50 = vector.broadcast %49 : vector<1x32xf32> to vector<8x32xf32>
    %51 = arith.addf %48, %50 : vector<8x32xf32>
    %52 = arith.addf %51, %1 : vector<8x32xf32>
    %cst_26 = arith.constant dense<0.000000e+00> : vector<8xf32>
    %53 = vector.multi_reduction <add>, %52, %cst_26 [1] : vector<8x32xf32> to vector<8xf32>
    %54 = vector.shape_cast %53 : vector<8xf32> to vector<8x1xf32>
    %cst_27 = arith.constant 3.200000e+01 : f32
    %55 = vector.broadcast %cst_27 : f32 to vector<8x1xf32>
    %56 = arith.divf %54, %55 : vector<8x1xf32>
    %57 = vector.broadcast %56 : vector<8x1xf32> to vector<8x32xf32>
    %58 = arith.subf %52, %57 : vector<8x32xf32>
    %59 = arith.mulf %58, %58 : vector<8x32xf32>
    %cst_28 = arith.constant dense<0.000000e+00> : vector<8xf32>
    %60 = vector.multi_reduction <add>, %59, %cst_28 [1] : vector<8x32xf32> to vector<8xf32>
    %61 = vector.shape_cast %60 : vector<8xf32> to vector<8x1xf32>
    %cst_29 = arith.constant 3.200000e+01 : f32
    %62 = vector.broadcast %cst_29 : f32 to vector<8x1xf32>
    %63 = arith.divf %61, %62 : vector<8x1xf32>
    %cst_30 = arith.constant 9.99999974E-6 : f32
    %64 = vector.broadcast %cst_30 : f32 to vector<8x1xf32>
    %65 = arith.addf %63, %64 : vector<8x1xf32>
    %66 = math.rsqrt %65 : vector<8x1xf32>
    %67 = vector.broadcast %66 : vector<8x1xf32> to vector<8x32xf32>
    %68 = arith.mulf %58, %67 : vector<8x32xf32>
    %c0_31 = arith.constant 0 : index
    %c0_32 = arith.constant 0 : index
    %69 = vector.load %arg10[%c0_31, %c0_32] : memref<1x32xf32, #tpu.memory_space<vmem>>, vector<1x32xf32>
    %70 = vector.broadcast %69 : vector<1x32xf32> to vector<8x32xf32>
    %71 = arith.mulf %68, %70 : vector<8x32xf32>
    %c0_33 = arith.constant 0 : index
    %c0_34 = arith.constant 0 : index
    %72 = vector.load %arg11[%c0_33, %c0_34] : memref<1x32xf32, #tpu.memory_space<vmem>>, vector<1x32xf32>
    %73 = vector.broadcast %72 : vector<1x32xf32> to vector<8x32xf32>
    %74 = arith.addf %71, %73 : vector<8x32xf32>
    %75 = arith.truncf %74 : vector<8x32xf32> to vector<8x32xbf16>
    %c0_35 = arith.constant 0 : index
    %c0_36 = arith.constant 0 : index
    %76 = vector.load %arg12[%c0_35, %c0_36] : memref<32x64xbf16, #tpu.memory_space<vmem>>, vector<32x64xbf16>
    %cst_37 = arith.constant dense<0.000000e+00> : vector<8x64xf32>
    %77 = tpu.matmul %75, %76, %cst_37 {dimension_numbers = #tpu.dot_dimension_numbers<[1], [0], [0], [1], [0, 0, 1, 1], [], []>} : vector<8x32xbf16>, vector<32x64xbf16>, vector<8x64xf32> -> vector<8x64xf32>
    %c0_38 = arith.constant 0 : index
    %c0_39 = arith.constant 0 : index
    %78 = vector.load %arg13[%c0_38, %c0_39] : memref<1x64xf32, #tpu.memory_space<vmem>>, vector<1x64xf32>
    %79 = vector.broadcast %78 : vector<1x64xf32> to vector<8x64xf32>
    %80 = arith.addf %77, %79 : vector<8x64xf32>
    %cst_40 = arith.constant 0.000000e+00 : f32
    %81 = vector.broadcast %cst_40 : f32 to vector<8x64xf32>
    %82 = arith.maximumf %80, %81 : vector<8x64xf32>
    %83 = arith.truncf %82 : vector<8x64xf32> to vector<8x64xbf16>
    %c0_41 = arith.constant 0 : index
    %c0_42 = arith.constant 0 : index
    %84 = vector.load %arg14[%c0_41, %c0_42] : memref<64x32xbf16, #tpu.memory_space<vmem>>, vector<64x32xbf16>
    %cst_43 = arith.constant dense<0.000000e+00> : vector<8x32xf32>
    %85 = tpu.matmul %83, %84, %cst_43 {dimension_numbers = #tpu.dot_dimension_numbers<[1], [0], [0], [1], [0, 0, 1, 1], [], []>} : vector<8x64xbf16>, vector<64x32xbf16>, vector<8x32xf32> -> vector<8x32xf32>
    %c0_44 = arith.constant 0 : index
    %c0_45 = arith.constant 0 : index
    %86 = vector.load %arg15[%c0_44, %c0_45] : memref<1x32xf32, #tpu.memory_space<vmem>>, vector<1x32xf32>
    %87 = vector.broadcast %86 : vector<1x32xf32> to vector<8x32xf32>
    %88 = arith.addf %85, %87 : vector<8x32xf32>
    %89 = arith.addf %88, %74 : vector<8x32xf32>
    %cst_46 = arith.constant dense<0.000000e+00> : vector<8xf32>
    %90 = vector.multi_reduction <add>, %89, %cst_46 [1] : vector<8x32xf32> to vector<8xf32>
    %91 = vector.shape_cast %90 : vector<8xf32> to vector<8x1xf32>
    %cst_47 = arith.constant 3.200000e+01 : f32
    %92 = vector.broadcast %cst_47 : f32 to vector<8x1xf32>
    %93 = arith.divf %91, %92 : vector<8x1xf32>
    %94 = vector.broadcast %93 : vector<8x1xf32> to vector<8x32xf32>
    %95 = arith.subf %89, %94 : vector<8x32xf32>
    %96 = arith.mulf %95, %95 : vector<8x32xf32>
    %cst_48 = arith.constant dense<0.000000e+00> : vector<8xf32>
    %97 = vector.multi_reduction <add>, %96, %cst_48 [1] : vector<8x32xf32> to vector<8xf32>
    %98 = vector.shape_cast %97 : vector<8xf32> to vector<8x1xf32>
    %cst_49 = arith.constant 3.200000e+01 : f32
    %99 = vector.broadcast %cst_49 : f32 to vector<8x1xf32>
    %100 = arith.divf %98, %99 : vector<8x1xf32>
    %cst_50 = arith.constant 9.99999974E-6 : f32
    %101 = vector.broadcast %cst_50 : f32 to vector<8x1xf32>
    %102 = arith.addf %100, %101 : vector<8x1xf32>
    %103 = math.rsqrt %102 : vector<8x1xf32>
    %104 = vector.broadcast %103 : vector<8x1xf32> to vector<8x32xf32>
    %105 = arith.mulf %95, %104 : vector<8x32xf32>
    %c0_51 = arith.constant 0 : index
    %c0_52 = arith.constant 0 : index
    %106 = vector.load %arg16[%c0_51, %c0_52] : memref<1x32xf32, #tpu.memory_space<vmem>>, vector<1x32xf32>
    %107 = vector.broadcast %106 : vector<1x32xf32> to vector<8x32xf32>
    %108 = arith.mulf %105, %107 : vector<8x32xf32>
    %c0_53 = arith.constant 0 : index
    %c0_54 = arith.constant 0 : index
    %109 = vector.load %arg17[%c0_53, %c0_54] : memref<1x32xf32, #tpu.memory_space<vmem>>, vector<1x32xf32>
    %110 = vector.broadcast %109 : vector<1x32xf32> to vector<8x32xf32>
    %111 = arith.addf %108, %110 : vector<8x32xf32>
    %c0_55 = arith.constant 0 : index
    %c0_56 = arith.constant 0 : index
    %c0_57 = arith.constant 0 : index
    %112 = vector.load %arg18[%c0_55, %c0_56, %c0_57] : memref<1x8x32xf32, #tpu.memory_space<vmem>>, vector<1x8x32xf32>
    %113 = vector.shape_cast %112 : vector<1x8x32xf32> to vector<8x32xf32>
    %114 = vector.shape_cast %111 : vector<8x32xf32> to vector<1x8x32xf32>
    tpu.vector_store %arg18[%c0_55, %c0_56, %c0_57], %114 {strides = array<i32>} : memref<1x8x32xf32, #tpu.memory_space<vmem>>, vector<1x8x32xf32>,
    return
  }
  func.func @transform_0(%arg0: i32) -> (i32, i32, i32) {
    %c0_i32 = arith.constant 0 : i32
    %c0_i32_0 = arith.constant 0 : i32
    %c0_i32_1 = arith.constant 0 : i32
    return %arg0, %c0_i32, %c0_i32_0 : i32, i32, i32
  }
  func.func @transform_1(%arg0: i32) -> (i32, i32) {
    %c0_i32 = arith.constant 0 : i32
    %c0_i32_0 = arith.constant 0 : i32
    %c0_i32_1 = arith.constant 0 : i32
    return %c0_i32, %c0_i32_0 : i32, i32
  }
  func.func @transform_2(%arg0: i32) -> (i32, i32) {
    %c0_i32 = arith.constant 0 : i32
    %c0_i32_0 = arith.constant 0 : i32
    %c0_i32_1 = arith.constant 0 : i32
    return %c0_i32, %c0_i32_0 : i32, i32
  }
  func.func @transform_3(%arg0: i32) -> (i32, i32) {
    %c0_i32 = arith.constant 0 : i32
    %c0_i32_0 = arith.constant 0 : i32
    %c0_i32_1 = arith.constant 0 : i32
    return %c0_i32, %c0_i32_0 : i32, i32
  }
  func.func @transform_4(%arg0: i32) -> (i32, i32) {
    %c0_i32 = arith.constant 0 : i32
    %c0_i32_0 = arith.constant 0 : i32
    %c0_i32_1 = arith.constant 0 : i32
    return %c0_i32, %c0_i32_0 : i32, i32
  }
  func.func @transform_5(%arg0: i32) -> (i32, i32) {
    %c0_i32 = arith.constant 0 : i32
    %c0_i32_0 = arith.constant 0 : i32
    %c0_i32_1 = arith.constant 0 : i32
    return %c0_i32, %c0_i32_0 : i32, i32
  }
  func.func @transform_6(%arg0: i32) -> (i32, i32) {
    %c0_i32 = arith.constant 0 : i32
    %c0_i32_0 = arith.constant 0 : i32
    %c0_i32_1 = arith.constant 0 : i32
    return %c0_i32, %c0_i32_0 : i32, i32
  }
  func.func @transform_7(%arg0: i32) -> (i32, i32) {
    %c0_i32 = arith.constant 0 : i32
    %c0_i32_0 = arith.constant 0 : i32
    %c0_i32_1 = arith.constant 0 : i32
    return %c0_i32, %c0_i32_0 : i32, i32
  }
  func.func @transform_8(%arg0: i32) -> (i32, i32) {
    %c0_i32 = arith.constant 0 : i32
    %c0_i32_0 = arith.constant 0 : i32
    %c0_i32_1 = arith.constant 0 : i32
    return %c0_i32, %c0_i32_0 : i32, i32
  }
  func.func @transform_9(%arg0: i32) -> (i32, i32) {
    %c0_i32 = arith.constant 0 : i32
    %c0_i32_0 = arith.constant 0 : i32
    %c0_i32_1 = arith.constant 0 : i32
    return %c0_i32, %c0_i32_0 : i32, i32
  }
  func.func @transform_10(%arg0: i32) -> (i32, i32) {
    %c0_i32 = arith.constant 0 : i32
    %c0_i32_0 = arith.constant 0 : i32
    %c0_i32_1 = arith.constant 0 : i32
    return %c0_i32, %c0_i32_0 : i32, i32
  }
  func.func @transform_11(%arg0: i32) -> (i32, i32) {
    %c0_i32 = arith.constant 0 : i32
    %c0_i32_0 = arith.constant 0 : i32
    %c0_i32_1 = arith.constant 0 : i32
    return %c0_i32, %c0_i32_0 : i32, i32
  }
  func.func @transform_12(%arg0: i32) -> (i32, i32) {
    %c0_i32 = arith.constant 0 : i32
    %c0_i32_0 = arith.constant 0 : i32
    %c0_i32_1 = arith.constant 0 : i32
    return %c0_i32, %c0_i32_0 : i32, i32
  }
  func.func @transform_13(%arg0: i32) -> (i32, i32) {
    %c0_i32 = arith.constant 0 : i32
    %c0_i32_0 = arith.constant 0 : i32
    %c0_i32_1 = arith.constant 0 : i32
    return %c0_i32, %c0_i32_0 : i32, i32
  }
  func.func @transform_14(%arg0: i32) -> (i32, i32) {
    %c0_i32 = arith.constant 0 : i32
    %c0_i32_0 = arith.constant 0 : i32
    %c0_i32_1 = arith.constant 0 : i32
    return %c0_i32, %c0_i32_0 : i32, i32
  }
  func.func @transform_15(%arg0: i32) -> (i32, i32) {
    %c0_i32 = arith.constant 0 : i32
    %c0_i32_0 = arith.constant 0 : i32
    %c0_i32_1 = arith.constant 0 : i32
    return %c0_i32, %c0_i32_0 : i32, i32
  }
  func.func @transform_16(%arg0: i32) -> (i32, i32) {
    %c0_i32 = arith.constant 0 : i32
    %c0_i32_0 = arith.constant 0 : i32
    %c0_i32_1 = arith.constant 0 : i32
    return %c0_i32, %c0_i32_0 : i32, i32
  }
  func.func @transform_17(%arg0: i32) -> (i32, i32, i32) {
    %c0_i32 = arith.constant 0 : i32
    %c0_i32_0 = arith.constant 0 : i32
    %c0_i32_1 = arith.constant 0 : i32
    return %arg0, %c0_i32, %c0_i32_0 : i32, i32, i32
  }
}

</mosaic_0001>

<llo_original>
// kernel: tpu_custom_call.1
$region0: #{tpu_custom_call.1}
  #allocation0 [shape = 'u32[]', space=smem, size = 0x4, offset = 0x4, fixed_abs, tag = 'smem constant byte address 0x4 - core index']
  #allocation1 [shape = 'u32[72,128]{1,0:T(1,128)}', space=vmem, size = 0x9000, scoped, tag = 'internal scratch']
  %s0 = inlined_call_operand.vmem [shape: f32[2,8,32], index: 0, kind: input, shape index: {}]
  %s1 = inlined_call_operand.vmem [shape: bf16[32,32], index: 1, kind: input, shape index: {}]
  %s2 = inlined_call_operand.vmem [shape: f32[1,32], index: 2, kind: input, shape index: {}]
  %s3 = inlined_call_operand.vmem [shape: bf16[32,32], index: 3, kind: input, shape index: {}]
  %s4 = inlined_call_operand.vmem [shape: f32[1,32], index: 4, kind: input, shape index: {}]
  %s5 = inlined_call_operand.hbm [shape: bf16[32,32], index: 5, kind: input, shape index: {}]
  %s6 = inlined_call_operand.vmem [shape: f32[1,32], index: 6, kind: input, shape index: {}]
  %s7 = inlined_call_operand.hbm [shape: bf16[32,32], index: 7, kind: input, shape index: {}]
  %s8 = inlined_call_operand.vmem [shape: f32[1,32], index: 8, kind: input, shape index: {}]
  %s9 = inlined_call_operand.vmem [shape: f32[1,32], index: 9, kind: input, shape index: {}]
  %s10 = inlined_call_operand.vmem [shape: f32[1,32], index: 10, kind: input, shape index: {}]
  %s11 = inlined_call_operand.hbm [shape: bf16[32,64], index: 11, kind: input, shape index: {}]
  %s12 = inlined_call_operand.vmem [shape: f32[1,64], index: 12, kind: input, shape index: {}]
  %s13 = inlined_call_operand.vmem [shape: bf16[64,32], index: 13, kind: input, shape index: {}]
  %s14 = inlined_call_operand.vmem [shape: f32[1,32], index: 14, kind: input, shape index: {}]
  %s15 = inlined_call_operand.vmem [shape: f32[1,32], index: 15, kind: input, shape index: {}]
  %s16 = inlined_call_operand.vmem [shape: f32[1,32], index: 16, kind: input, shape index: {}]
  %s17 = inlined_call_operand.hbm [shape: f32[2,8,32], index: 17, kind: output, shape index: {}]
  %s18 = sld [smem:[#allocation0]]
  $region113: #{tpu_custom_call.1} parent=0
    _
  %s20 = ssub.s32 1, %s18
  %s21 = scalar_select 0, %s20, %s18
  $region1: #{tpu_custom_call.1} parent=0
    #allocation2 [shape = 'u8[8192]{0}', space=vmem, size = 0x2000, scoped, tag = 'input window, operand 5, single buffered']
    #allocation3 [shape = 's32[2]{0}', space=sflag, size = 0x8, scoped, tag = 'scoped memory for tpu_custom_call.1']
    #allocation4 [shape = 's32[2]{0}', space=sflag, size = 0x8, scoped, tag = 'scoped memory for tpu_custom_call.1']
    #allocation5 [shape = 'u8[8192]{0}', space=vmem, size = 0x2000, scoped, tag = 'input window, operand 7, single buffered']
    #allocation6 [shape = 's32[1]{0}', space=sflag, size = 0x4, scoped, tag = 'scoped memory for tpu_custom_call.1']
    #allocation7 [shape = 'u8[8192]{0}', space=vmem, size = 0x2000, scoped, tag = 'input window, operand 11, single buffered']
    #allocation8 [shape = 'u8[8192]{0}', space=vmem, size = 0x2000, scoped, tag = 'output window, operand 0']
    %22 = vsyncpa [#allocation3], 0
    %23 = vsyncpa [#allocation6], 0
    %24 = vsyncpa [#allocation4], 0
    %s25 = scalar_lea.sflag [#allocation4], 1
    %26 = vsyncpa %s25, 0
    loop: start=0, step=1, limit=4
    $region2: #{tpu_custom_call.1} parent=1 // loop_pre_header
      _
    $region3: #{tpu_custom_call.1} parent=1 // loop_header
      %s28 = sphi 0, %s32
      %p29 = scmp.ge.s32.totalorder %s28, 4
      %s38 = sphi 0, %s40
      %s41 = sphi 0, %s38
      %s42 = sphi 0, %s41
      %s58 = sphi 0, %s42
      %s62 = sphi 0, %s62
      %s64 = sphi 0, %s62
      %s65 = sphi 0, %s64
      %s79 = sphi 0, %s65
      %s83 = sphi 0, %s83
      %s85 = sphi 0, %s83
      %s86 = sphi 0, %s85
      %s100 = sphi 0, %s86
      %s104 = sphi 0, %s104
      %s106 = sphi 0, %s104
      %s107 = sphi 0, %s106
      %s121 = sphi 0, %s107
      %s125 = sphi 0, %s125
      %s127 = sphi 0, %s125
      %s128 = sphi 0, %s127
      %s142 = sphi 0, %s128
      %s146 = sphi 0, %s146
      %s148 = sphi 0, %s146
      %s149 = sphi 0, %s148
      %s163 = sphi 0, %s149
      %s167 = sphi 0, %s167
      %s169 = sphi 0, %s167
      %s170 = sphi 0, %s169
      %s184 = sphi 0, %s170
      %s188 = sphi 0, %s188
      %s190 = sphi 0, %s188
      %s191 = sphi 0, %s190
      %s205 = sphi 0, %s191
      %s209 = sphi 0, %s209
      %s211 = sphi 0, %s209
      %s212 = sphi 0, %s211
      %s226 = sphi 0, %s212
      %s230 = sphi 0, %s230
      %s232 = sphi 0, %s230
      %s233 = sphi 0, %s232
      %s247 = sphi 0, %s233
      %s251 = sphi 0, %s251
      %s253 = sphi 0, %s251
      %s254 = sphi 0, %s253
      %s268 = sphi 0, %s254
      %s272 = sphi 0, %s272
      %s274 = sphi 0, %s272
      %s275 = sphi 0, %s274
      %s289 = sphi 0, %s275
      %s293 = sphi 0, %s293
      %s295 = sphi 0, %s293
      %s296 = sphi 0, %s295
      %s310 = sphi 0, %s296
      %s314 = sphi 0, %s314
      %s316 = sphi 0, %s314
      %s317 = sphi 0, %s316
      %s331 = sphi 0, %s317
      %s335 = sphi 0, %s335
      %s337 = sphi 0, %s335
      %s338 = sphi 0, %s337
      %s352 = sphi 0, %s338
      %s356 = sphi 0, %s356
      %s358 = sphi 0, %s356
      %s359 = sphi 0, %s358
      %s373 = sphi 0, %s359
      %s377 = sphi 0, %s377
      %s379 = sphi 0, %s377
      %s380 = sphi 0, %s379
      %s394 = sphi 0, %s380
      %s400 = sphi 0, %s402
      %s403 = sphi 0, %s400
      %s404 = sphi 0, %s403
      %s420 = sphi 0, %s404
    $region4: #{tpu_custom_call.1} parent=1 // loop_header_branch
      %31 = sbr.rel (%p29) target = $region8
    $region5: #{tpu_custom_call.1} parent=1 // loop_body
      %s33 = ssub.s32 %s28, 1
      %s34 = ssub.s32 %s28, 2
      %s35 = sadd.s32 %s28, 1
      %s36 = ssub.s32 %s28, %s35
      %p37 = scmp.eq.s32.totalorder %s36, 0
      %s39 = sadd.s32 %s38, 1
      %s40 = scalar_select %p37, %s38, %s39
      %p43 = pneg %p37
      %p44 = scmp.eq.s32.totalorder %s28, 1
      %p45 = por %p43, %p44
      %p46 = scmp.ne.s32.totalorder %s38, %s41
      %p47 = scmp.eq.s32.totalorder %s28, 0
      %p48 = por %p46, %p47
      %p49 = scmp.ne.s32.totalorder %s38, %s41
      %p50 = scmp.eq.s32.totalorder %s33, 1
      %p51 = por %p49, %p50
      %p52 = scmp.ne.s32.totalorder %s41, %s42
      %p53 = scmp.eq.s32.totalorder %s33, 0
      %p54 = por %p52, %p53
      %p55 = scmp.ne.s32.totalorder %s41, %s42
      %p56 = scmp.eq.s32.totalorder %s34, 1
      %p57 = por %p55, %p56
      %p59 = scmp.ne.s32.totalorder %s42, %s58
      %p60 = scmp.eq.s32.totalorder %s34, 0
      %p61 = por %p59, %p60
      %s63 = sadd.s32 %s62, 1
      %p66 = scmp.eq.s32.totalorder %s28, 1
      %p67 = scmp.ne.s32.totalorder %s62, %s64
      %p68 = scmp.eq.s32.totalorder %s28, 0
      %p69 = por %p67, %p68
      %p70 = scmp.ne.s32.totalorder %s62, %s64
      %p71 = scmp.eq.s32.totalorder %s33, 1
      %p72 = por %p70, %p71
      %p73 = scmp.ne.s32.totalorder %s64, %s65
      %p74 = scmp.eq.s32.totalorder %s33, 0
      %p75 = por %p73, %p74
      %p76 = scmp.ne.s32.totalorder %s64, %s65
      %p77 = scmp.eq.s32.totalorder %s34, 1
      %p78 = por %p76, %p77
      %p80 = scmp.ne.s32.totalorder %s65, %s79
      %p81 = scmp.eq.s32.totalorder %s34, 0
      %p82 = por %p80, %p81
      %s84 = sadd.s32 %s83, 1
      %p87 = scmp.eq.s32.totalorder %s28, 1
      %p88 = scmp.ne.s32.totalorder %s83, %s85
      %p89 = scmp.eq.s32.totalorder %s28, 0
      %p90 = por %p88, %p89
      %p91 = scmp.ne.s32.totalorder %s83, %s85
      %p92 = scmp.eq.s32.totalorder %s33, 1
      %p93 = por %p91, %p92
      %p94 = scmp.ne.s32.totalorder %s85, %s86
      %p95 = scmp.eq.s32.totalorder %s33, 0
      %p96 = por %p94, %p95
      %p97 = scmp.ne.s32.totalorder %s85, %s86
      %p98 = scmp.eq.s32.totalorder %s34, 1
      %p99 = por %p97, %p98
      %p101 = scmp.ne.s32.totalorder %s86, %s100
      %p102 = scmp.eq.s32.totalorder %s34, 0
      %p103 = por %p101, %p102
      %s105 = sadd.s32 %s104, 1
      %p108 = scmp.eq.s32.totalorder %s28, 1
      %p109 = scmp.ne.s32.totalorder %s104, %s106
      %p110 = scmp.eq.s32.totalorder %s28, 0
      %p111 = por %p109, %p110
      %p112 = scmp.ne.s32.totalorder %s104, %s106
      %p113 = scmp.eq.s32.totalorder %s33, 1
      %p114 = por %p112, %p113
      %p115 = scmp.ne.s32.totalorder %s106, %s107
      %p116 = scmp.eq.s32.totalorder %s33, 0
      %p117 = por %p115, %p116
      %p118 = scmp.ne.s32.totalorder %s106, %s107
      %p119 = scmp.eq.s32.totalorder %s34, 1
      %p120 = por %p118, %p119
      %p122 = scmp.ne.s32.totalorder %s107, %s121
      %p123 = scmp.eq.s32.totalorder %s34, 0
      %p124 = por %p122, %p123
      %s126 = sadd.s32 %s125, 1
      %p129 = scmp.eq.s32.totalorder %s28, 1
      %p130 = scmp.ne.s32.totalorder %s125, %s127
      %p131 = scmp.eq.s32.totalorder %s28, 0
      %p132 = por %p130, %p131
      %p133 = scmp.ne.s32.totalorder %s125, %s127
      %p134 = scmp.eq.s32.totalorder %s33, 1
      %p135 = por %p133, %p134
      %p136 = scmp.ne.s32.totalorder %s127, %s128
      %p137 = scmp.eq.s32.totalorder %s33, 0
      %p138 = por %p136, %p137
      %p139 = scmp.ne.s32.totalorder %s127, %s128
      %p140 = scmp.eq.s32.totalorder %s34, 1
      %p141 = por %p139, %p140
      %p143 = scmp.ne.s32.totalorder %s128, %s142
      %p144 = scmp.eq.s32.totalorder %s34, 0
      %p145 = por %p143, %p144
      %s147 = sadd.s32 %s146, 1
      %p150 = scmp.eq.s32.totalorder %s28, 1
      %p151 = scmp.ne.s32.totalorder %s146, %s148
      %p152 = scmp.eq.s32.totalorder %s28, 0
      %p153 = por %p151, %p152
      %p154 = scmp.ne.s32.totalorder %s146, %s148
      %p155 = scmp.eq.s32.totalorder %s33, 1
      %p156 = por %p154, %p155
      %p157 = scmp.ne.s32.totalorder %s148, %s149
      %p158 = scmp.eq.s32.totalorder %s33, 0
      %p159 = por %p157, %p158
      %p160 = scmp.ne.s32.totalorder %s148, %s149
      %p161 = scmp.eq.s32.totalorder %s34, 1
      %p162 = por %p160, %p161
      %p164 = scmp.ne.s32.totalorder %s149, %s163
      %p165 = scmp.eq.s32.totalorder %s34, 0
      %p166 = por %p164, %p165
      %s168 = sadd.s32 %s167, 1
      %p171 = scmp.eq.s32.totalorder %s28, 1
      %p172 = scmp.ne.s32.totalorder %s167, %s169
      %p173 = scmp.eq.s32.totalorder %s28, 0
      %p174 = por %p172, %p173
      %p175 = scmp.ne.s32.totalorder %s167, %s169
      %p176 = scmp.eq.s32.totalorder %s33, 1
      %p177 = por %p175, %p176
      %p178 = scmp.ne.s32.totalorder %s169, %s170
      %p179 = scmp.eq.s32.totalorder %s33, 0
      %p180 = por %p178, %p179
      %p181 = scmp.ne.s32.totalorder %s169, %s170
      %p182 = scmp.eq.s32.totalorder %s34, 1
      %p183 = por %p181, %p182
      %p185 = scmp.ne.s32.totalorder %s170, %s184
      %p186 = scmp.eq.s32.totalorder %s34, 0
      %p187 = por %p185, %p186
      %s189 = sadd.s32 %s188, 1
      %p192 = scmp.eq.s32.totalorder %s28, 1
      %p193 = scmp.ne.s32.totalorder %s188, %s190
      %p194 = scmp.eq.s32.totalorder %s28, 0
      %p195 = por %p193, %p194
      %p196 = scmp.ne.s32.totalorder %s188, %s190
      %p197 = scmp.eq.s32.totalorder %s33, 1
      %p198 = por %p196, %p197
      %p199 = scmp.ne.s32.totalorder %s190, %s191
      %p200 = scmp.eq.s32.totalorder %s33, 0
      %p201 = por %p199, %p200
      %p202 = scmp.ne.s32.totalorder %s190, %s191
      %p203 = scmp.eq.s32.totalorder %s34, 1
      %p204 = por %p202, %p203
      %p206 = scmp.ne.s32.totalorder %s191, %s205
      %p207 = scmp.eq.s32.totalorder %s34, 0
      %p208 = por %p206, %p207
      %s210 = sadd.s32 %s209, 1
      %p213 = scmp.eq.s32.totalorder %s28, 1
      %p214 = scmp.ne.s32.totalorder %s209, %s211
      %p215 = scmp.eq.s32.totalorder %s28, 0
      %p216 = por %p214, %p215
      %p217 = scmp.ne.s32.totalorder %s209, %s211
      %p218 = scmp.eq.s32.totalorder %s33, 1
      %p219 = por %p217, %p218
      %p220 = scmp.ne.s32.totalorder %s211, %s212
      %p221 = scmp.eq.s32.totalorder %s33, 0
      %p222 = por %p220, %p221
      %p223 = scmp.ne.s32.totalorder %s211, %s212
      %p224 = scmp.eq.s32.totalorder %s34, 1
      %p225 = por %p223, %p224
      %p227 = scmp.ne.s32.totalorder %s212, %s226
      %p228 = scmp.eq.s32.totalorder %s34, 0
      %p229 = por %p227, %p228
      %s231 = sadd.s32 %s230, 1
      %p234 = scmp.eq.s32.totalorder %s28, 1
      %p235 = scmp.ne.s32.totalorder %s230, %s232
      %p236 = scmp.eq.s32.totalorder %s28, 0
      %p237 = por %p235, %p236
      %p238 = scmp.ne.s32.totalorder %s230, %s232
      %p239 = scmp.eq.s32.totalorder %s33, 1
      %p240 = por %p238, %p239
      %p241 = scmp.ne.s32.totalorder %s232, %s233
      %p242 = scmp.eq.s32.totalorder %s33, 0
      %p243 = por %p241, %p242
      %p244 = scmp.ne.s32.totalorder %s232, %s233
      %p245 = scmp.eq.s32.totalorder %s34, 1
      %p246 = por %p244, %p245
      %p248 = scmp.ne.s32.totalorder %s233, %s247
      %p249 = scmp.eq.s32.totalorder %s34, 0
      %p250 = por %p248, %p249
      %s252 = sadd.s32 %s251, 1
      %p255 = scmp.eq.s32.totalorder %s28, 1
      %p256 = scmp.ne.s32.totalorder %s251, %s253
      %p257 = scmp.eq.s32.totalorder %s28, 0
      %p258 = por %p256, %p257
      %p259 = scmp.ne.s32.totalorder %s251, %s253
      %p260 = scmp.eq.s32.totalorder %s33, 1
      %p261 = por %p259, %p260
      %p262 = scmp.ne.s32.totalorder %s253, %s254
      %p263 = scmp.eq.s32.totalorder %s33, 0
      %p264 = por %p262, %p263
      %p265 = scmp.ne.s32.totalorder %s253, %s254
      %p266 = scmp.eq.s32.totalorder %s34, 1
      %p267 = por %p265, %p266
      %p269 = scmp.ne.s32.totalorder %s254, %s268
      %p270 = scmp.eq.s32.totalorder %s34, 0
      %p271 = por %p269, %p270
      %s273 = sadd.s32 %s272, 1
      %p276 = scmp.eq.s32.totalorder %s28, 1
      %p277 = scmp.ne.s32.totalorder %s272, %s274
      %p278 = scmp.eq.s32.totalorder %s28, 0
      %p279 = por %p277, %p278
      %p280 = scmp.ne.s32.totalorder %s272, %s274
      %p281 = scmp.eq.s32.totalorder %s33, 1
      %p282 = por %p280, %p281
      %p283 = scmp.ne.s32.totalorder %s274, %s275
      %p284 = scmp.eq.s32.totalorder %s33, 0
      %p285 = por %p283, %p284
      %p286 = scmp.ne.s32.totalorder %s274, %s275
      %p287 = scmp.eq.s32.totalorder %s34, 1
      %p288 = por %p286, %p287
      %p290 = scmp.ne.s32.totalorder %s275, %s289
      %p291 = scmp.eq.s32.totalorder %s34, 0
      %p292 = por %p290, %p291
      %s294 = sadd.s32 %s293, 1
      %p297 = scmp.eq.s32.totalorder %s28, 1
      %p298 = scmp.ne.s32.totalorder %s293, %s295
      %p299 = scmp.eq.s32.totalorder %s28, 0
      %p300 = por %p298, %p299
      %p301 = scmp.ne.s32.totalorder %s293, %s295
      %p302 = scmp.eq.s32.totalorder %s33, 1
      %p303 = por %p301, %p302
      %p304 = scmp.ne.s32.totalorder %s295, %s296
      %p305 = scmp.eq.s32.totalorder %s33, 0
      %p306 = por %p304, %p305
      %p307 = scmp.ne.s32.totalorder %s295, %s296
      %p308 = scmp.eq.s32.totalorder %s34, 1
      %p309 = por %p307, %p308
      %p311 = scmp.ne.s32.totalorder %s296, %s310
      %p312 = scmp.eq.s32.totalorder %s34, 0
      %p313 = por %p311, %p312
      %s315 = sadd.s32 %s314, 1
      %p318 = scmp.eq.s32.totalorder %s28, 1
      %p319 = scmp.ne.s32.totalorder %s314, %s316
      %p320 = scmp.eq.s32.totalorder %s28, 0
      %p321 = por %p319, %p320
      %p322 = scmp.ne.s32.totalorder %s314, %s316
      %p323 = scmp.eq.s32.totalorder %s33, 1
      %p324 = por %p322, %p323
      %p325 = scmp.ne.s32.totalorder %s316, %s317
      %p326 = scmp.eq.s32.totalorder %s33, 0
      %p327 = por %p325, %p326
      %p328 = scmp.ne.s32.totalorder %s316, %s317
      %p329 = scmp.eq.s32.totalorder %s34, 1
      %p330 = por %p328, %p329
      %p332 = scmp.ne.s32.totalorder %s317, %s331
      %p333 = scmp.eq.s32.totalorder %s34, 0
      %p334 = por %p332, %p333
      %s336 = sadd.s32 %s335, 1
      %p339 = scmp.eq.s32.totalorder %s28, 1
      %p340 = scmp.ne.s32.totalorder %s335, %s337
      %p341 = scmp.eq.s32.totalorder %s28, 0
      %p342 = por %p340, %p341
      %p343 = scmp.ne.s32.totalorder %s335, %s337
      %p344 = scmp.eq.s32.totalorder %s33, 1
      %p345 = por %p343, %p344
      %p346 = scmp.ne.s32.totalorder %s337, %s338
      %p347 = scmp.eq.s32.totalorder %s33, 0
      %p348 = por %p346, %p347
      %p349 = scmp.ne.s32.totalorder %s337, %s338
      %p350 = scmp.eq.s32.totalorder %s34, 1
      %p351 = por %p349, %p350
      %p353 = scmp.ne.s32.totalorder %s338, %s352
      %p354 = scmp.eq.s32.totalorder %s34, 0
      %p355 = por %p353, %p354
      %s357 = sadd.s32 %s356, 1
      %p360 = scmp.eq.s32.totalorder %s28, 1
      %p361 = scmp.ne.s32.totalorder %s356, %s358
      %p362 = scmp.eq.s32.totalorder %s28, 0
      %p363 = por %p361, %p362
      %p364 = scmp.ne.s32.totalorder %s356, %s358
      %p365 = scmp.eq.s32.totalorder %s33, 1
      %p366 = por %p364, %p365
      %p367 = scmp.ne.s32.totalorder %s358, %s359
      %p368 = scmp.eq.s32.totalorder %s33, 0
      %p369 = por %p367, %p368
      %p370 = scmp.ne.s32.totalorder %s358, %s359
      %p371 = scmp.eq.s32.totalorder %s34, 1
      %p372 = por %p370, %p371
      %p374 = scmp.ne.s32.totalorder %s359, %s373
      %p375 = scmp.eq.s32.totalorder %s34, 0
      %p376 = por %p374, %p375
      %s378 = sadd.s32 %s377, 1
      %p381 = scmp.eq.s32.totalorder %s28, 1
      %p382 = scmp.ne.s32.totalorder %s377, %s379
      %p383 = scmp.eq.s32.totalorder %s28, 0
      %p384 = por %p382, %p383
      %p385 = scmp.ne.s32.totalorder %s377, %s379
      %p386 = scmp.eq.s32.totalorder %s33, 1
      %p387 = por %p385, %p386
      %p388 = scmp.ne.s32.totalorder %s379, %s380
      %p389 = scmp.eq.s32.totalorder %s33, 0
      %p390 = por %p388, %p389
      %p391 = scmp.ne.s32.totalorder %s379, %s380
      %p392 = scmp.eq.s32.totalorder %s34, 1
      %p393 = por %p391, %p392
      %p395 = scmp.ne.s32.totalorder %s380, %s394
      %p396 = scmp.eq.s32.totalorder %s34, 0
      %p397 = por %p395, %p396
      %s398 = ssub.s32 %s28, %s35
      %p399 = scmp.eq.s32.totalorder %s398, 0
      %s401 = sadd.s32 %s400, 1
      %s402 = scalar_select %p399, %s400, %s401
      %p405 = pneg %p399
      %p406 = scmp.eq.s32.totalorder %s28, 1
      %p407 = por %p405, %p406
      %p408 = scmp.ne.s32.totalorder %s400, %s403
      %p409 = scmp.eq.s32.totalorder %s28, 0
      %p410 = por %p408, %p409
      %p411 = scmp.ne.s32.totalorder %s400, %s403
      %p412 = scmp.eq.s32.totalorder %s33, 1
      %p413 = por %p411, %p412
      %p414 = scmp.ne.s32.totalorder %s403, %s404
      %p415 = scmp.eq.s32.totalorder %s33, 0
      %p416 = por %p414, %p415
      %p417 = scmp.ne.s32.totalorder %s403, %s404
      %p418 = scmp.eq.s32.totalorder %s34, 1
      %p419 = por %p417, %p418
      %p421 = scmp.ne.s32.totalorder %s404, %s420
      %p422 = scmp.eq.s32.totalorder %s34, 0
      %p423 = por %p421, %p422
      %p424 = scmp.le.s32.totalorder 1, %s28
      %p425 = scmp.lt.s32.totalorder %s28, 3
      %p426 = pnand %p424, %p425
      %p427 = pneg %p426
      // Predicated region
      $region9: #{tpu_custom_call.1} parent=5 // pred_check
        _
      $region10: #{tpu_custom_call.1} parent=5 // pred_check_branch
        %429 = sbr.rel (%p426) target = $region12
      $region11: #{tpu_custom_call.1} parent=5 // pred_region
        %s430 = ssub.s32 %s28, 1
        // Predicated region
        $region13: #{tpu_custom_call.1} parent=11 // pred_check
          %p431 = pneg %p75
        $region14: #{tpu_custom_call.1} parent=11 // pred_check_branch
          %433 = sbr.rel (%p431) target = $region16
        $region15: #{tpu_custom_call.1} parent=11 // pred_region
          _
        $region16: #{tpu_custom_call.1} parent=11 // pred_fallthru
          _
        // Predicated region
        $region17: #{tpu_custom_call.1} parent=11 // pred_check
          %p434 = pneg %p96
        $region18: #{tpu_custom_call.1} parent=11 // pred_check_branch
          %436 = sbr.rel (%p434) target = $region20
        $region19: #{tpu_custom_call.1} parent=11 // pred_region
          _
        $region20: #{tpu_custom_call.1} parent=11 // pred_fallthru
          _
        // Predicated region
        $region21: #{tpu_custom_call.1} parent=11 // pred_check
          %p437 = pneg %p117
        $region22: #{tpu_custom_call.1} parent=11 // pred_check_branch
          %439 = sbr.rel (%p437) target = $region24
        $region23: #{tpu_custom_call.1} parent=11 // pred_region
          _
        $region24: #{tpu_custom_call.1} parent=11 // pred_fallthru
          _
        // Predicated region
        $region25: #{tpu_custom_call.1} parent=11 // pred_check
          %p440 = pneg %p138
        $region26: #{tpu_custom_call.1} parent=11 // pred_check_branch
          %442 = sbr.rel (%p440) target = $region28
        $region27: #{tpu_custom_call.1} parent=11 // pred_region
          _
        $region28: #{tpu_custom_call.1} parent=11 // pred_fallthru
          _
        // Predicated region
        $region29: #{tpu_custom_call.1} parent=11 // pred_check
          %p443 = pneg %p159
        $region30: #{tpu_custom_call.1} parent=11 // pred_check_branch
          %445 = sbr.rel (%p443) target = $region32
        $region31: #{tpu_custom_call.1} parent=11 // pred_region
          %447 = vsyncadd [#allocation3], 0
          %s448 = sshll.u32 %s5, 4
          %s449 = int_to_ptr.hbm [resolvable:$true] %s448
          %s450 = sshll.u32 [#allocation2], 4
          %s451 = int_to_ptr.vmem [resolvable:$true] %s450
          %456 = dma.hbm_to_vmem [thread:$0]  %s449, 256, %s451, [#allocation3], 64, 64, 4
        $region32: #{tpu_custom_call.1} parent=11 // pred_fallthru
          _
        // Predicated region
        $region33: #{tpu_custom_call.1} parent=11 // pred_check
          %p457 = pneg %p180
        $region34: #{tpu_custom_call.1} parent=11 // pred_check_branch
          %459 = sbr.rel (%p457) target = $region36
        $region35: #{tpu_custom_call.1} parent=11 // pred_region
          _
        $region36: #{tpu_custom_call.1} parent=11 // pred_fallthru
          _
        // Predicated region
        $region37: #{tpu_custom_call.1} parent=11 // pred_check
          %p460 = pneg %p201
        $region38: #{tpu_custom_call.1} parent=11 // pred_check_branch
          %462 = sbr.rel (%p460) target = $region40
        $region39: #{tpu_custom_call.1} parent=11 // pred_region
          %464 = vsyncadd [#allocation6], 0
          %s465 = sshll.u32 %s7, 4
          %s466 = int_to_ptr.hbm [resolvable:$true] %s465
          %s467 = sshll.u32 [#allocation5], 4
          %s468 = int_to_ptr.vmem [resolvable:$true] %s467
          %473 = dma.hbm_to_vmem [thread:$0]  %s466, 256, %s468, [#allocation6], 64, 64, 4
        $region40: #{tpu_custom_call.1} parent=11 // pred_fallthru
          _
        // Predicated region
        $region41: #{tpu_custom_call.1} parent=11 // pred_check
          %p474 = pneg %p222
        $region42: #{tpu_custom_call.1} parent=11 // pred_check_branch
          %476 = sbr.rel (%p474) target = $region44
        $region43: #{tpu_custom_call.1} parent=11 // pred_region
          _
        $region44: #{tpu_custom_call.1} parent=11 // pred_fallthru
          _
        // Predicated region
        $region45: #{tpu_custom_call.1} parent=11 // pred_check
          %p477 = pneg %p243
        $region46: #{tpu_custom_call.1} parent=11 // pred_check_branch
          %479 = sbr.rel (%p477) target = $region48
        $region47: #{tpu_custom_call.1} parent=11 // pred_region
          _
        $region48: #{tpu_custom_call.1} parent=11 // pred_fallthru
          _
        // Predicated region
        $region49: #{tpu_custom_call.1} parent=11 // pred_check
          %p480 = pneg %p264
        $region50: #{tpu_custom_call.1} parent=11 // pred_check_branch
          %482 = sbr.rel (%p480) target = $region52
        $region51: #{tpu_custom_call.1} parent=11 // pred_region
          _
        $region52: #{tpu_custom_call.1} parent=11 // pred_fallthru
          _
        // Predicated region
        $region53: #{tpu_custom_call.1} parent=11 // pred_check
          %p483 = pneg %p285
        $region54: #{tpu_custom_call.1} parent=11 // pred_check_branch
          %485 = sbr.rel (%p483) target = $region56
        $region55: #{tpu_custom_call.1} parent=11 // pred_region
          %487 = vsyncadd [#allocation6], 0
          %s488 = sshll.u32 %s11, 4
          %s489 = int_to_ptr.hbm [resolvable:$true] %s488
          %s490 = sshll.u32 [#allocation7], 4
          %s491 = int_to_ptr.vmem [resolvable:$true] %s490
          %496 = dma.hbm_to_vmem [thread:$0]  %s489, 256, %s491, [#allocation6], 64, 64, 4
        $region56: #{tpu_custom_call.1} parent=11 // pred_fallthru
          _
        // Predicated region
        $region57: #{tpu_custom_call.1} parent=11 // pred_check
          %p497 = pneg %p306
        $region58: #{tpu_custom_call.1} parent=11 // pred_check_branch
          %499 = sbr.rel (%p497) target = $region60
        $region59: #{tpu_custom_call.1} parent=11 // pred_region
          _
        $region60: #{tpu_custom_call.1} parent=11 // pred_fallthru
          _
        // Predicated region
        $region61: #{tpu_custom_call.1} parent=11 // pred_check
          %p500 = pneg %p327
        $region62: #{tpu_custom_call.1} parent=11 // pred_check_branch
          %502 = sbr.rel (%p500) target = $region64
        $region63: #{tpu_custom_call.1} parent=11 // pred_region
          _
        $region64: #{tpu_custom_call.1} parent=11 // pred_fallthru
          _
        // Predicated region
        $region65: #{tpu_custom_call.1} parent=11 // pred_check
          %p503 = pneg %p348
        $region66: #{tpu_custom_call.1} parent=11 // pred_check_branch
          %505 = sbr.rel (%p503) target = $region68
        $region67: #{tpu_custom_call.1} parent=11 // pred_region
          _
        $region68: #{tpu_custom_call.1} parent=11 // pred_fallthru
          _
        // Predicated region
        $region69: #{tpu_custom_call.1} parent=11 // pred_check
          %p506 = pneg %p369
        $region70: #{tpu_custom_call.1} parent=11 // pred_check_branch
          %508 = sbr.rel (%p506) target = $region72
        $region71: #{tpu_custom_call.1} parent=11 // pred_region
          _
        $region72: #{tpu_custom_call.1} parent=11 // pred_fallthru
          _
        // Predicated region
        $region73: #{tpu_custom_call.1} parent=11 // pred_check
          %p509 = pneg %p390
        $region74: #{tpu_custom_call.1} parent=11 // pred_check_branch
          %511 = sbr.rel (%p509) target = $region76
        $region75: #{tpu_custom_call.1} parent=11 // pred_region
          _
        $region76: #{tpu_custom_call.1} parent=11 // pred_fallthru
          _
      $region12: #{tpu_custom_call.1} parent=5 // pred_fallthru
        _
      %p512 = scmp.lt.s32.totalorder %s28, 2
      // Predicated region
      $region77: #{tpu_custom_call.1} parent=5 // pred_check
        %p513 = pneg %p512
      $region78: #{tpu_custom_call.1} parent=5 // pred_check_branch
        %515 = sbr.rel (%p513) target = $region80
      $region79: #{tpu_custom_call.1} parent=5 // pred_region
        // Predicated region
        $region81: #{tpu_custom_call.1} parent=79 // pred_check
          %p516 = pneg %p48
        $region82: #{tpu_custom_call.1} parent=79 // pred_check_branch
          %518 = sbr.rel (%p516) target = $region84
        $region83: #{tpu_custom_call.1} parent=79 // pred_region
          %p519 = scmp.lt.s32.totalorder %s28, 1
          %s520 = scalar_select %p519, %s28, 1
          %s521 = smul.addr %s520, 8
          %s522 = scalar_lea.vmem %s0, %s521
        $region84: #{tpu_custom_call.1} parent=79 // pred_fallthru
          _
      $region80: #{tpu_custom_call.1} parent=5 // pred_fallthru
        _
      %p523 = scmp.le.s32.totalorder 1, %s28
      %p524 = scmp.lt.s32.totalorder %s28, 3
      %p525 = pnand %p523, %p524
      %p526 = pneg %p525
      // Predicated region
      $region85: #{tpu_custom_call.1} parent=5 // pred_check
        _
      $region86: #{tpu_custom_call.1} parent=5 // pred_check_branch
        %528 = sbr.rel (%p525) target = $region88
      $region87: #{tpu_custom_call.1} parent=5 // pred_region
        %s529 = ssub.s32 %s28, 1
        // Predicated region
        $region89: #{tpu_custom_call.1} parent=87 // pred_check
          %p530 = pneg %p159
        $region90: #{tpu_custom_call.1} parent=87 // pred_check_branch
          %532 = sbr.rel (%p530) target = $region92
        $region91: #{tpu_custom_call.1} parent=87 // pred_region
          %534 = dma.done [#allocation3], 256
        $region92: #{tpu_custom_call.1} parent=87 // pred_fallthru
          _
        // Predicated region
        $region93: #{tpu_custom_call.1} parent=87 // pred_check
          %p535 = pneg %p201
        $region94: #{tpu_custom_call.1} parent=87 // pred_check_branch
          %537 = sbr.rel (%p535) target = $region96
        $region95: #{tpu_custom_call.1} parent=87 // pred_region
          %539 = dma.done [#allocation6], 256
        $region96: #{tpu_custom_call.1} parent=87 // pred_fallthru
          _
        // Predicated region
        $region97: #{tpu_custom_call.1} parent=87 // pred_check
          %p540 = pneg %p285
        $region98: #{tpu_custom_call.1} parent=87 // pred_check_branch
          %542 = sbr.rel (%p540) target = $region100
        $region99: #{tpu_custom_call.1} parent=87 // pred_region
          %544 = dma.done [#allocation6], 256
        $region100: #{tpu_custom_call.1} parent=87 // pred_fallthru
          _
        %p545 = scmp.lt.s32.totalorder %s33, 1
        %s546 = scalar_select %p545, %s33, 1
        %s547 = smul.addr %s546, 8
        %s548 = scalar_lea.vmem %s0, %s547
        %p549 = pneg %p54
        %p550 = pneg %p51
        %p551 = pneg %p75
        %p552 = pneg %p72
        %p553 = pneg %p96
        %p554 = pneg %p93
        %p555 = pneg %p117
        %p556 = pneg %p114
        %p557 = pneg %p138
        %p558 = pneg %p135
        %p559 = pneg %p159
        %p560 = pneg %p156
        %p561 = pneg %p180
        %p562 = pneg %p177
        %p563 = pneg %p201
        %p564 = pneg %p198
        %p565 = pneg %p222
        %p566 = pneg %p219
        %p567 = pneg %p243
        %p568 = pneg %p240
        %p569 = pneg %p264
        %p570 = pneg %p261
        %p571 = pneg %p285
        %p572 = pneg %p282
        %p573 = pneg %p306
        %p574 = pneg %p303
        %p575 = pneg %p327
        %p576 = pneg %p324
        %p577 = pneg %p348
        %p578 = pneg %p345
        %p579 = pneg %p369
        %p580 = pneg %p366
        %p581 = pneg %p390
        %p582 = pneg %p387
        %p583 = pneg %p416
        %p584 = pneg %p413
        %s585 = sand.u32 %s403, 1
        %s586 = scalar_lea.sflag [#allocation4], %s585
        %s587 = sand.u32 %s403, 1
        %s588 = smul.addr %s587, 8
        %s589 = scalar_lea.vmem [#allocation8], %s588
        %p590 = scmp.lt.s32.totalorder %s33, 1
        %s591 = scalar_select %p590, %s33, 1
        %s592 = smul.addr %s591, 8
        %s593 = scalar_lea.vmem %s0, %s592
        %v595 = vld [vmem:[%s593] sm:$0xff]
        %v596 = vpack.c.bf16 %v595, %v595
        %v597 = vld [vmem:[%s1] sm:$0xf]
        %v598 = vld [vmem:[%s1 + $0x4] sm:$0xf]
        %v599 = vld [vmem:[%s1 + $0x8] sm:$0xf]
        %v600 = vld [vmem:[%s1 + $0xc] sm:$0xf]
        %v601 = vld [vmem:[%s2] sm:$0x1]
        %v603 = vperm.slane %v601, 0
        %v609 = vunpack.c.l.b16 %v597
        %v610 = vunpack.c.l.b16 %v598
        %v611 = vunpack.c.l.b16 %v599
        %v612 = vunpack.c.l.b16 %v600
        %v613 = vpack.c.b16 %v610, %v609
        %v614 = vpack.c.b16 %v612, %v611
        %vm617 = vcmask 261120
        %v619 = vsel %vm617, %v596, 0
        %621 = vmatpush.bf16.msra.mxu0 0
        %622 = vmatpush.bf16.msra.mxu0 0
        %623 = vmatpush.bf16.msra.mxu0 0
        %624 = vmatpush.bf16.msra.mxu0 0
        %625 = vmatpush.bf16.msra.mxu0 0
        %626 = vmatpush.bf16.msra.mxu0 0
        %627 = vmatpush.bf16.msra.mxu0 %v614
        %628 = vmatpush.bf16.msra.mxu0 %v613
        %629 = vmatmul.bf16.gmra.mxu0 %v619
        %v630 = vpop.f32.mrf.mxu0
        %v631 = vadd.f32 %v603, %v630
        %v632 = vpop.f32.mrf.mxu0
        %633 = vdwg.mxu0
        %v634 = vld [vmem:[%s3] sm:$0xf]
        %v635 = vld [vmem:[%s3 + $0x4] sm:$0xf]
        %v636 = vld [vmem:[%s3 + $0x8] sm:$0xf]
        %v637 = vld [vmem:[%s3 + $0xc] sm:$0xf]
        %v638 = vld [vmem:[%s4] sm:$0x1]
        %v640 = vperm.slane %v638, 0
        %v646 = vunpack.c.l.b16 %v634
        %v647 = vunpack.c.l.b16 %v635
        %v648 = vunpack.c.l.b16 %v636
        %v649 = vunpack.c.l.b16 %v637
        %v650 = vpack.c.b16 %v647, %v646
        %v651 = vpack.c.b16 %v649, %v648
        %654 = vmatpush.bf16.msra.mxu0 0
        %655 = vmatpush.bf16.msra.mxu0 0
        %656 = vmatpush.bf16.msra.mxu0 0
        %657 = vmatpush.bf16.msra.mxu0 0
        %658 = vmatpush.bf16.msra.mxu0 0
        %659 = vmatpush.bf16.msra.mxu0 0
        %660 = vmatpush.bf16.msra.mxu0 %v651
        %661 = vmatpush.bf16.msra.mxu0 %v650
        %662 = vmatmul.bf16.gmra.mxu0 %v619
        %v663 = vpop.f32.mrf.mxu0
        %v664 = vadd.f32 %v640, %v663
        %v665 = vpop.f32.mrf.mxu0
        %666 = vdwg.mxu0
        %v667 = vld [vmem:[#allocation2] sm:$0xf]
        %v668 = vld [vmem:[#allocation2 + $0x4] sm:$0xf]
        %v669 = vld [vmem:[#allocation2 + $0x8] sm:$0xf]
        %v670 = vld [vmem:[#allocation2 + $0xc] sm:$0xf]
        %v671 = vld [vmem:[%s6] sm:$0x1]
        %v673 = vperm.slane %v671, 0
        %v679 = vunpack.c.l.b16 %v667
        %v680 = vunpack.c.l.b16 %v668
        %v681 = vunpack.c.l.b16 %v669
        %v682 = vunpack.c.l.b16 %v670
        %v683 = vpack.c.b16 %v680, %v679
        %v684 = vpack.c.b16 %v682, %v681
        %687 = vmatpush.bf16.msra.mxu0 0
        %688 = vmatpush.bf16.msra.mxu0 0
        %689 = vmatpush.bf16.msra.mxu0 0
        %690 = vmatpush.bf16.msra.mxu0 0
        %691 = vmatpush.bf16.msra.mxu0 0
        %692 = vmatpush.bf16.msra.mxu0 0
        %693 = vmatpush.bf16.msra.mxu0 %v684
        %694 = vmatpush.bf16.msra.mxu0 %v683
        %695 = vmatmul.bf16.gmra.mxu0 %v619
        %v696 = vpop.f32.mrf.mxu0
        %v697 = vadd.f32 %v673, %v696
        %v698 = vpop.f32.mrf.mxu0
        %699 = vdwg.mxu0
        %701 = vrot.lane.b32.xlu0 %v631, 120
        %v702 = vpop.permute.xlu0 %701
        %704 = vrot.lane.b32.xlu0 %v631, 112
        %v705 = vpop.permute.xlu0 %704
        %707 = vrot.lane.b32.xlu0 %v631, 104
        %v708 = vpop.permute.xlu0 %707
        %v710 = vrot.slane %v705, 4
        %vm711 = vcmask 1047556
        %v712 = vsel %vm711, %v710, %v631
        %v713 = vrot.slane %v631, 4
        %v714 = vsel %vm711, %v705, %v713
        %v716 = vunpack.c.l.s4 1983009808
        %v717 = vunpack.c.0.s8 %v716
        %v718 = vperm.slane %v712, %v717
        %v720 = vunpack.c.l.s4 1983009808
        %v721 = vunpack.c.0.s8 %v720
        %v722 = vperm.slane %v714, %v721
        %v723 = vrot.slane %v708, 4
        %v724 = vsel %vm711, %v723, %v702
        %v725 = vrot.slane %v702, 4
        %v726 = vsel %vm711, %v708, %v725
        %v728 = vunpack.c.l.s4 1983009808
        %v729 = vunpack.c.0.s8 %v728
        %v730 = vperm.slane %v724, %v729
        %v732 = vunpack.c.l.s4 1983009808
        %v733 = vunpack.c.0.s8 %v732
        %v734 = vperm.slane %v726, %v733
        %v735 = vrot.slane %v730, 4
        %v736 = vsel %vm711, %v735, %v718
        %v737 = vrot.slane %v718, 4
        %v738 = vsel %vm711, %v730, %v737
        %v740 = vunpack.c.l.s4 1934713408
        %v741 = vunpack.c.0.s8 %v740
        %v742 = vperm.slane %v736, %v741
        %v744 = vunpack.c.l.s4 1934713408
        %v745 = vunpack.c.0.s8 %v744
        %v746 = vperm.slane %v738, %v745
        %v747 = vrot.slane %v734, 4
        %v748 = vsel %vm711, %v747, %v722
        %v749 = vrot.slane %v722, 4
        %v750 = vsel %vm711, %v734, %v749
        %v752 = vunpack.c.l.s4 1934713408
        %v753 = vunpack.c.0.s8 %v752
        %v754 = vperm.slane %v748, %v753
        %v756 = vunpack.c.l.s4 1934713408
        %v757 = vunpack.c.0.s8 %v756
        %v758 = vperm.slane %v750, %v757
        %v759 = vrot.slane %v742, 4
        %v760 = vsel %vm711, 0.0, %v759
        %v761 = vrot.slane %v746, 4
        %v762 = vsel %vm711, 0.0, %v761
        %v763 = vrot.slane %v754, 4
        %v764 = vsel %vm711, 0.0, %v763
        %v765 = vrot.slane %v758, 4
        %v766 = vsel %vm711, 0.0, %v765
        %v767 = vsel %vm711, %v761, %v742
        %v769 = vunpack.c.l.s4 1983009808
        %v770 = vunpack.c.0.s8 %v769
        %v771 = vperm.slane %v767, %v770
        %v772 = vrot.slane %v762, 4
        %v773 = vsel %vm711, %v772, %v760
        %v775 = vunpack.c.l.s4 1983009808
        %v776 = vunpack.c.0.s8 %v775
        %v777 = vperm.slane %v773, %v776
        %v778 = vsel %vm711, %v765, %v754
        %v780 = vunpack.c.l.s4 1983009808
        %v781 = vunpack.c.0.s8 %v780
        %v782 = vperm.slane %v778, %v781
        %v783 = vrot.slane %v766, 4
        %v784 = vsel %vm711, %v783, %v764
        %v786 = vunpack.c.l.s4 1983009808
        %v787 = vunpack.c.0.s8 %v786
        %v788 = vperm.slane %v784, %v787
        %v789 = vrot.slane %v777, 4
        %v790 = vsel %vm711, %v789, %v771
        %v791 = vrot.slane %v771, 4
        %v792 = vsel %vm711, %v777, %v791
        %v794 = vunpack.c.l.s4 1934713408
        %v795 = vunpack.c.0.s8 %v794
        %v796 = vperm.slane %v790, %v795
        %v798 = vunpack.c.l.s4 1934713408
        %v799 = vunpack.c.0.s8 %v798
        %v800 = vperm.slane %v792, %v799
        %v801 = vrot.slane %v788, 4
        %v802 = vsel %vm711, %v801, %v782
        %v803 = vrot.slane %v782, 4
        %v804 = vsel %vm711, %v788, %v803
        %v806 = vunpack.c.l.s4 1934713408
        %v807 = vunpack.c.0.s8 %v806
        %v808 = vperm.slane %v802, %v807
        %v810 = vunpack.c.l.s4 1934713408
        %v811 = vunpack.c.0.s8 %v810
        %v812 = vperm.slane %v804, %v811
        %v813 = vrot.slane %v808, 4
        %v814 = vsel %vm711, %v813, %v796
        %v815 = vrot.slane %v796, 4
        %v816 = vsel %vm711, %v808, %v815
        %v817 = vrot.slane %v812, 4
        %v818 = vsel %vm711, %v817, %v800
        %v819 = vrot.slane %v800, 4
        %v820 = vsel %vm711, %v812, %v819
        %v821 = vpack.c.bf16 %v814, %v814
        %v822 = vpack.c.bf16 %v816, %v816
        %v823 = vpack.c.bf16 %v818, %v818
        %v824 = vpack.c.bf16 %v820, %v820
        %826 = vrot.lane.b32.xlu0 %v664, 120
        %v827 = vpop.permute.xlu0 %826
        %829 = vrot.lane.b32.xlu0 %v664, 112
        %v830 = vpop.permute.xlu0 %829
        %832 = vrot.lane.b32.xlu0 %v664, 104
        %v833 = vpop.permute.xlu0 %832
        %v835 = vrot.slane %v830, 4
        %v836 = vsel %vm711, %v835, %v664
        %v837 = vrot.slane %v664, 4
        %v838 = vsel %vm711, %v830, %v837
        %v840 = vunpack.c.l.s4 1983009808
        %v841 = vunpack.c.0.s8 %v840
        %v842 = vperm.slane %v836, %v841
        %v844 = vunpack.c.l.s4 1983009808
        %v845 = vunpack.c.0.s8 %v844
        %v846 = vperm.slane %v838, %v845
        %v847 = vrot.slane %v833, 4
        %v848 = vsel %vm711, %v847, %v827
        %v849 = vrot.slane %v827, 4
        %v850 = vsel %vm711, %v833, %v849
        %v852 = vunpack.c.l.s4 1983009808
        %v853 = vunpack.c.0.s8 %v852
        %v854 = vperm.slane %v848, %v853
        %v856 = vunpack.c.l.s4 1983009808
        %v857 = vunpack.c.0.s8 %v856
        %v858 = vperm.slane %v850, %v857
        %v859 = vrot.slane %v854, 4
        %v860 = vsel %vm711, %v859, %v842
        %v861 = vrot.slane %v842, 4
        %v862 = vsel %vm711, %v854, %v861
        %v864 = vunpack.c.l.s4 1934713408
        %v865 = vunpack.c.0.s8 %v864
        %v866 = vperm.slane %v860, %v865
        %v868 = vunpack.c.l.s4 1934713408
        %v869 = vunpack.c.0.s8 %v868
        %v870 = vperm.slane %v862, %v869
        %v871 = vrot.slane %v858, 4
        %v872 = vsel %vm711, %v871, %v846
        %v873 = vrot.slane %v846, 4
        %v874 = vsel %vm711, %v858, %v873
        %v876 = vunpack.c.l.s4 1934713408
        %v877 = vunpack.c.0.s8 %v876
        %v878 = vperm.slane %v872, %v877
        %v880 = vunpack.c.l.s4 1934713408
        %v881 = vunpack.c.0.s8 %v880
        %v882 = vperm.slane %v874, %v881
        %v883 = vrot.slane %v866, 4
        %v884 = vsel %vm711, 0.0, %v883
        %v885 = vrot.slane %v870, 4
        %v886 = vsel %vm711, 0.0, %v885
        %v887 = vrot.slane %v878, 4
        %v888 = vsel %vm711, 0.0, %v887
        %v889 = vrot.slane %v882, 4
        %v890 = vsel %vm711, 0.0, %v889
        %v891 = vsel %vm711, %v885, %v866
        %v893 = vunpack.c.l.s4 1983009808
        %v894 = vunpack.c.0.s8 %v893
        %v895 = vperm.slane %v891, %v894
        %v896 = vrot.slane %v886, 4
        %v897 = vsel %vm711, %v896, %v884
        %v899 = vunpack.c.l.s4 1983009808
        %v900 = vunpack.c.0.s8 %v899
        %v901 = vperm.slane %v897, %v900
        %v902 = vsel %vm711, %v889, %v878
        %v904 = vunpack.c.l.s4 1983009808
        %v905 = vunpack.c.0.s8 %v904
        %v906 = vperm.slane %v902, %v905
        %v907 = vrot.slane %v890, 4
        %v908 = vsel %vm711, %v907, %v888
        %v910 = vunpack.c.l.s4 1983009808
        %v911 = vunpack.c.0.s8 %v910
        %v912 = vperm.slane %v908, %v911
        %v913 = vrot.slane %v901, 4
        %v914 = vsel %vm711, %v913, %v895
        %v915 = vrot.slane %v895, 4
        %v916 = vsel %vm711, %v901, %v915
        %v918 = vunpack.c.l.s4 1934713408
        %v919 = vunpack.c.0.s8 %v918
        %v920 = vperm.slane %v914, %v919
        %v922 = vunpack.c.l.s4 1934713408
        %v923 = vunpack.c.0.s8 %v922
        %v924 = vperm.slane %v916, %v923
        %v925 = vrot.slane %v912, 4
        %v926 = vsel %vm711, %v925, %v906
        %v927 = vrot.slane %v906, 4
        %v928 = vsel %vm711, %v912, %v927
        %v930 = vunpack.c.l.s4 1934713408
        %v931 = vunpack.c.0.s8 %v930
        %v932 = vperm.slane %v926, %v931
        %v934 = vunpack.c.l.s4 1934713408
        %v935 = vunpack.c.0.s8 %v934
        %v936 = vperm.slane %v928, %v935
        %v937 = vrot.slane %v932, 4
        %v938 = vsel %vm711, %v937, %v920
        %v939 = vrot.slane %v920, 4
        %v940 = vsel %vm711, %v932, %v939
        %v941 = vrot.slane %v936, 4
        %v942 = vsel %vm711, %v941, %v924
        %v943 = vrot.slane %v924, 4
        %v944 = vsel %vm711, %v936, %v943
        %v945 = vpack.c.bf16 %v938, %v938
        %v946 = vpack.c.bf16 %v940, %v940
        %v947 = vpack.c.bf16 %v942, %v942
        %v948 = vpack.c.bf16 %v944, %v944
        %950 = vrot.lane.b32.xlu0 %v697, 120
        %v951 = vpop.permute.xlu0 %950
        %953 = vrot.lane.b32.xlu0 %v697, 112
        %v954 = vpop.permute.xlu0 %953
        %956 = vrot.lane.b32.xlu0 %v697, 104
        %v957 = vpop.permute.xlu0 %956
        %v959 = vrot.slane %v954, 4
        %v960 = vsel %vm711, %v959, %v697
        %v961 = vrot.slane %v697, 4
        %v962 = vsel %vm711, %v954, %v961
        %v964 = vunpack.c.l.s4 1983009808
        %v965 = vunpack.c.0.s8 %v964
        %v966 = vperm.slane %v960, %v965
        %v968 = vunpack.c.l.s4 1983009808
        %v969 = vunpack.c.0.s8 %v968
        %v970 = vperm.slane %v962, %v969
        %v971 = vrot.slane %v957, 4
        %v972 = vsel %vm711, %v971, %v951
        %v973 = vrot.slane %v951, 4
        %v974 = vsel %vm711, %v957, %v973
        %v976 = vunpack.c.l.s4 1983009808
        %v977 = vunpack.c.0.s8 %v976
        %v978 = vperm.slane %v972, %v977
        %v980 = vunpack.c.l.s4 1983009808
        %v981 = vunpack.c.0.s8 %v980
        %v982 = vperm.slane %v974, %v981
        %v983 = vrot.slane %v978, 4
        %v984 = vsel %vm711, %v983, %v966
        %v985 = vrot.slane %v966, 4
        %v986 = vsel %vm711, %v978, %v985
        %v988 = vunpack.c.l.s4 1934713408
        %v989 = vunpack.c.0.s8 %v988
        %v990 = vperm.slane %v984, %v989
        %v992 = vunpack.c.l.s4 1934713408
        %v993 = vunpack.c.0.s8 %v992
        %v994 = vperm.slane %v986, %v993
        %v995 = vrot.slane %v982, 4
        %v996 = vsel %vm711, %v995, %v970
        %v997 = vrot.slane %v970, 4
        %v998 = vsel %vm711, %v982, %v997
        %v1000 = vunpack.c.l.s4 1934713408
        %v1001 = vunpack.c.0.s8 %v1000
        %v1002 = vperm.slane %v996, %v1001
        %v1004 = vunpack.c.l.s4 1934713408
        %v1005 = vunpack.c.0.s8 %v1004
        %v1006 = vperm.slane %v998, %v1005
        %v1007 = vrot.slane %v990, 4
        %v1008 = vsel %vm711, 0.0, %v1007
        %v1009 = vrot.slane %v994, 4
        %v1010 = vsel %vm711, 0.0, %v1009
        %v1011 = vrot.slane %v1002, 4
        %v1012 = vsel %vm711, 0.0, %v1011
        %v1013 = vrot.slane %v1006, 4
        %v1014 = vsel %vm711, 0.0, %v1013
        %v1015 = vsel %vm711, %v1009, %v990
        %v1017 = vunpack.c.l.s4 1983009808
        %v1018 = vunpack.c.0.s8 %v1017
        %v1019 = vperm.slane %v1015, %v1018
        %v1020 = vrot.slane %v1010, 4
        %v1021 = vsel %vm711, %v1020, %v1008
        %v1023 = vunpack.c.l.s4 1983009808
        %v1024 = vunpack.c.0.s8 %v1023
        %v1025 = vperm.slane %v1021, %v1024
        %v1026 = vsel %vm711, %v1013, %v1002
        %v1028 = vunpack.c.l.s4 1983009808
        %v1029 = vunpack.c.0.s8 %v1028
        %v1030 = vperm.slane %v1026, %v1029
        %v1031 = vrot.slane %v1014, 4
        %v1032 = vsel %vm711, %v1031, %v1012
        %v1034 = vunpack.c.l.s4 1983009808
        %v1035 = vunpack.c.0.s8 %v1034
        %v1036 = vperm.slane %v1032, %v1035
        %v1037 = vrot.slane %v1025, 4
        %v1038 = vsel %vm711, %v1037, %v1019
        %v1039 = vrot.slane %v1019, 4
        %v1040 = vsel %vm711, %v1025, %v1039
        %v1042 = vunpack.c.l.s4 1934713408
        %v1043 = vunpack.c.0.s8 %v1042
        %v1044 = vperm.slane %v1038, %v1043
        %v1046 = vunpack.c.l.s4 1934713408
        %v1047 = vunpack.c.0.s8 %v1046
        %v1048 = vperm.slane %v1040, %v1047
        %v1049 = vrot.slane %v1036, 4
        %v1050 = vsel %vm711, %v1049, %v1030
        %v1051 = vrot.slane %v1030, 4
        %v1052 = vsel %vm711, %v1036, %v1051
        %v1054 = vunpack.c.l.s4 1934713408
        %v1055 = vunpack.c.0.s8 %v1054
        %v1056 = vperm.slane %v1050, %v1055
        %v1058 = vunpack.c.l.s4 1934713408
        %v1059 = vunpack.c.0.s8 %v1058
        %v1060 = vperm.slane %v1052, %v1059
        %v1061 = vrot.slane %v1056, 4
        %v1062 = vsel %vm711, %v1061, %v1044
        %v1063 = vrot.slane %v1044, 4
        %v1064 = vsel %vm711, %v1056, %v1063
        %v1065 = vrot.slane %v1060, 4
        %v1066 = vsel %vm711, %v1065, %v1048
        %v1067 = vrot.slane %v1048, 4
        %v1068 = vsel %vm711, %v1060, %v1067
        %v1069 = vpack.c.bf16 %v1062, %v1062
        %v1070 = vpack.c.bf16 %v1064, %v1064
        %v1071 = vpack.c.bf16 %v1066, %v1066
        %v1072 = vpack.c.bf16 %v1068, %v1068
        %vm1073 = vcmask 64512
        %v1075 = vsel %vm1073, %v821, 0
        %v1078 = vsel %vm1073, %v945, 0
        %1080 = vmatpush.bf16.xpose.msra.mxu0 0
        %1081 = vmatpush.bf16.xpose.msra.mxu0 0
        %1082 = vmatpush.bf16.xpose.msra.mxu0 0
        %1083 = vmatpush.bf16.xpose.msra.mxu0 0
        %1084 = vmatpush.bf16.xpose.msra.mxu0 0
        %1085 = vmatpush.bf16.xpose.msra.mxu0 0
        %1086 = vmatpush.bf16.xpose.msra.mxu0 0
        %1087 = vmatpush.bf16.xpose.msra.mxu0 %v1078
        %1088 = vmatmul.bf16.gmra.mxu0 %v1075
        %v1089 = vpop.f32.mrf.mxu0
        %v1090 = vadd.f32 0.0, %v1089
        %v1091 = vpop.f32.mrf.mxu0
        %1092 = vdwg.mxu0
        %v1094 = vsel %vm1073, %v822, 0
        %v1097 = vsel %vm1073, %v946, 0
        %1099 = vmatpush.bf16.xpose.msra.mxu0 0
        %1100 = vmatpush.bf16.xpose.msra.mxu0 0
        %1101 = vmatpush.bf16.xpose.msra.mxu0 0
        %1102 = vmatpush.bf16.xpose.msra.mxu0 0
        %1103 = vmatpush.bf16.xpose.msra.mxu0 0
        %1104 = vmatpush.bf16.xpose.msra.mxu0 0
        %1105 = vmatpush.bf16.xpose.msra.mxu0 0
        %1106 = vmatpush.bf16.xpose.msra.mxu0 %v1097
        %1107 = vmatmul.bf16.gmra.mxu0 %v1094
        %v1108 = vpop.f32.mrf.mxu0
        %v1109 = vadd.f32 0.0, %v1108
        %v1110 = vpop.f32.mrf.mxu0
        %1111 = vdwg.mxu0
        %v1113 = vsel %vm1073, %v823, 0
        %v1116 = vsel %vm1073, %v947, 0
        %1118 = vmatpush.bf16.xpose.msra.mxu0 0
        %1119 = vmatpush.bf16.xpose.msra.mxu0 0
        %1120 = vmatpush.bf16.xpose.msra.mxu0 0
        %1121 = vmatpush.bf16.xpose.msra.mxu0 0
        %1122 = vmatpush.bf16.xpose.msra.mxu0 0
        %1123 = vmatpush.bf16.xpose.msra.mxu0 0
        %1124 = vmatpush.bf16.xpose.msra.mxu0 0
        %1125 = vmatpush.bf16.xpose.msra.mxu0 %v1116
        %1126 = vmatmul.bf16.gmra.mxu0 %v1113
        %v1127 = vpop.f32.mrf.mxu0
        %v1128 = vadd.f32 0.0, %v1127
        %v1129 = vpop.f32.mrf.mxu0
        %1130 = vdwg.mxu0
        %v1132 = vsel %vm1073, %v824, 0
        %v1135 = vsel %vm1073, %v948, 0
        %1137 = vmatpush.bf16.xpose.msra.mxu0 0
        %1138 = vmatpush.bf16.xpose.msra.mxu0 0
        %1139 = vmatpush.bf16.xpose.msra.mxu0 0
        %1140 = vmatpush.bf16.xpose.msra.mxu0 0
        %1141 = vmatpush.bf16.xpose.msra.mxu0 0
        %1142 = vmatpush.bf16.xpose.msra.mxu0 0
        %1143 = vmatpush.bf16.xpose.msra.mxu0 0
        %1144 = vmatpush.bf16.xpose.msra.mxu0 %v1135
        %1145 = vmatmul.bf16.gmra.mxu0 %v1132
        %v1146 = vpop.f32.mrf.mxu0
        %v1147 = vadd.f32 0.0, %v1146
        %v1148 = vpop.f32.mrf.mxu0
        %1149 = vdwg.mxu0
        %v1150 = vmul.f32 %v1090, 0.35355338
        %v1151 = vmul.f32 %v1109, 0.35355338
        %v1152 = vmul.f32 %v1128, 0.35355338
        %v1153 = vmul.f32 %v1147, 0.35355338
        %v1154 = vsel %vm1073, %v1150, -inf
        %1155 = vmax.xlane.f32.xlu0 %v1154
        %v1156 = vpop.xlane.xlu0 %1155
        %v1157 = vsel %vm1073, %v1151, -inf
        %1158 = vmax.xlane.f32.xlu0 %v1157
        %v1159 = vpop.xlane.xlu0 %1158
        %v1160 = vsel %vm1073, %v1152, -inf
        %1161 = vmax.xlane.f32.xlu0 %v1160
        %v1162 = vpop.xlane.xlu0 %1161
        %v1163 = vsel %vm1073, %v1153, -inf
        %1164 = vmax.xlane.f32.xlu0 %v1163
        %v1165 = vpop.xlane.xlu0 %1164
        %v1166 = vsub.f32 %v1150, %v1156
        %v1167 = vsub.f32 %v1151, %v1159
        %v1168 = vsub.f32 %v1152, %v1162
        %v1169 = vsub.f32 %v1153, %v1165
        %v1170 = vmul.f32 %v1166, 1.442695
        %v1171 = vpow.pop %v1170
        %v1172 = vmul.f32 %v1167, 1.442695
        %v1173 = vpow.pop %v1172
        %v1174 = vmul.f32 %v1168, 1.442695
        %v1175 = vpow.pop %v1174
        %v1176 = vmul.f32 %v1169, 1.442695
        %v1177 = vpow.pop %v1176
        %v1178 = vsel %vm1073, %v1171, 0.0
        %1179 = vadd.xlane.f32.xlu0 %v1178
        %v1180 = vpop.xlane.xlu0 %1179
        %v1181 = vsel %vm1073, %v1173, 0.0
        %1182 = vadd.xlane.f32.xlu0 %v1181
        %v1183 = vpop.xlane.xlu0 %1182
        %v1184 = vsel %vm1073, %v1175, 0.0
        %1185 = vadd.xlane.f32.xlu0 %v1184
        %v1186 = vpop.xlane.xlu0 %1185
        %v1187 = vsel %vm1073, %v1177, 0.0
        %1188 = vadd.xlane.f32.xlu0 %v1187
        %v1189 = vpop.xlane.xlu0 %1188
        %v1190 = vrcp.pop %v1180
        %v1191 = vrcp.pop %v1183
        %v1192 = vrcp.pop %v1186
        %v1193 = vrcp.pop %v1189
        %v1194 = vmul.f32 %v1171, %v1190
        %v1195 = vmul.f32 %v1173, %v1191
        %v1196 = vmul.f32 %v1175, %v1192
        %v1197 = vmul.f32 %v1177, %v1193
        %v1198 = vpack.c.bf16 %v1194, %v1194
        %v1199 = vpack.c.bf16 %v1195, %v1195
        %v1200 = vpack.c.bf16 %v1196, %v1196
        %v1201 = vpack.c.bf16 %v1197, %v1197
        %v1203 = vsel %vm1073, %v1198, 0
        %vm1205 = vcmask 1043456
        %v1207 = vsel %vm1205, %v1069, 0
        %1209 = vmatpush.bf16.msra.mxu0 0
        %1210 = vmatpush.bf16.msra.mxu0 0
        %1211 = vmatpush.bf16.msra.mxu0 0
        %1212 = vmatpush.bf16.msra.mxu0 0
        %1213 = vmatpush.bf16.msra.mxu0 0
        %1214 = vmatpush.bf16.msra.mxu0 0
        %1215 = vmatpush.bf16.msra.mxu0 0
        %1216 = vmatpush.bf16.msra.mxu0 %v1207
        %1217 = vmatmul.bf16.gmra.mxu0 %v1203
        %v1218 = vpop.f32.mrf.mxu0
        %v1219 = vadd.f32 0.0, %v1218
        %v1220 = vpop.f32.mrf.mxu0
        %1221 = vdwg.mxu0
        %v1223 = vsel %vm1073, %v1199, 0
        %v1226 = vsel %vm1205, %v1070, 0
        %1228 = vmatpush.bf16.msra.mxu0 0
        %1229 = vmatpush.bf16.msra.mxu0 0
        %1230 = vmatpush.bf16.msra.mxu0 0
        %1231 = vmatpush.bf16.msra.mxu0 0
        %1232 = vmatpush.bf16.msra.mxu0 0
        %1233 = vmatpush.bf16.msra.mxu0 0
        %1234 = vmatpush.bf16.msra.mxu0 0
        %1235 = vmatpush.bf16.msra.mxu0 %v1226
        %1236 = vmatmul.bf16.gmra.mxu0 %v1223
        %v1237 = vpop.f32.mrf.mxu0
        %v1238 = vadd.f32 0.0, %v1237
        %v1239 = vpop.f32.mrf.mxu0
        %1240 = vdwg.mxu0
        %v1242 = vsel %vm1073, %v1200, 0
        %v1245 = vsel %vm1205, %v1071, 0
        %1247 = vmatpush.bf16.msra.mxu0 0
        %1248 = vmatpush.bf16.msra.mxu0 0
        %1249 = vmatpush.bf16.msra.mxu0 0
        %1250 = vmatpush.bf16.msra.mxu0 0
        %1251 = vmatpush.bf16.msra.mxu0 0
        %1252 = vmatpush.bf16.msra.mxu0 0
        %1253 = vmatpush.bf16.msra.mxu0 0
        %1254 = vmatpush.bf16.msra.mxu0 %v1245
        %1255 = vmatmul.bf16.gmra.mxu0 %v1242
        %v1256 = vpop.f32.mrf.mxu0
        %v1257 = vadd.f32 0.0, %v1256
        %v1258 = vpop.f32.mrf.mxu0
        %1259 = vdwg.mxu0
        %v1261 = vsel %vm1073, %v1201, 0
        %v1264 = vsel %vm1205, %v1072, 0
        %1266 = vmatpush.bf16.msra.mxu0 0
        %1267 = vmatpush.bf16.msra.mxu0 0
        %1268 = vmatpush.bf16.msra.mxu0 0
        %1269 = vmatpush.bf16.msra.mxu0 0
        %1270 = vmatpush.bf16.msra.mxu0 0
        %1271 = vmatpush.bf16.msra.mxu0 0
        %1272 = vmatpush.bf16.msra.mxu0 0
        %1273 = vmatpush.bf16.msra.mxu0 %v1264
        %1274 = vmatmul.bf16.gmra.mxu0 %v1261
        %v1275 = vpop.f32.mrf.mxu0
        %v1276 = vadd.f32 0.0, %v1275
        %v1277 = vpop.f32.mrf.mxu0
        %1278 = vdwg.mxu0
        %v1279 = vrot.slane %v1257, 4
        %v1280 = vsel %vm711, %v1279, %v1219
        %v1281 = vrot.slane %v1219, 4
        %v1282 = vsel %vm711, %v1257, %v1281
        %v1284 = vunpack.c.l.s4 1983009808
        %v1285 = vunpack.c.0.s8 %v1284
        %v1286 = vperm.slane %v1280, %v1285
        %v1288 = vunpack.c.l.s4 1983009808
        %v1289 = vunpack.c.0.s8 %v1288
        %v1290 = vperm.slane %v1282, %v1289
        %v1291 = vrot.slane %v1276, 4
        %v1292 = vsel %vm711, %v1291, %v1238
        %v1293 = vrot.slane %v1238, 4
        %v1294 = vsel %vm711, %v1276, %v1293
        %v1296 = vunpack.c.l.s4 1983009808
        %v1297 = vunpack.c.0.s8 %v1296
        %v1298 = vperm.slane %v1292, %v1297
        %v1300 = vunpack.c.l.s4 1983009808
        %v1301 = vunpack.c.0.s8 %v1300
        %v1302 = vperm.slane %v1294, %v1301
        %v1303 = vrot.slane %v1298, 4
        %v1304 = vsel %vm711, %v1303, %v1286
        %v1305 = vrot.slane %v1286, 4
        %v1306 = vsel %vm711, %v1298, %v1305
        %v1308 = vunpack.c.l.s4 1934713408
        %v1309 = vunpack.c.0.s8 %v1308
        %v1310 = vperm.slane %v1304, %v1309
        %v1312 = vunpack.c.l.s4 1934713408
        %v1313 = vunpack.c.0.s8 %v1312
        %v1314 = vperm.slane %v1306, %v1313
        %v1315 = vrot.slane %v1302, 4
        %v1316 = vsel %vm711, %v1315, %v1290
        %v1317 = vrot.slane %v1290, 4
        %v1318 = vsel %vm711, %v1302, %v1317
        %v1320 = vunpack.c.l.s4 1934713408
        %v1321 = vunpack.c.0.s8 %v1320
        %v1322 = vperm.slane %v1316, %v1321
        %v1324 = vunpack.c.l.s4 1934713408
        %v1325 = vunpack.c.0.s8 %v1324
        %v1326 = vperm.slane %v1318, %v1325
        %v1327 = vrot.slane %v1310, 4
        %v1328 = vsel %vm711, 0.0, %v1327
        %v1329 = vrot.slane %v1314, 4
        %v1330 = vsel %vm711, 0.0, %v1329
        %v1331 = vrot.slane %v1322, 4
        %v1332 = vsel %vm711, 0.0, %v1331
        %v1333 = vrot.slane %v1326, 4
        %v1334 = vsel %vm711, 0.0, %v1333
        %v1335 = vsel %vm711, %v1329, %v1310
        %v1337 = vunpack.c.l.s4 1983009808
        %v1338 = vunpack.c.0.s8 %v1337
        %v1339 = vperm.slane %v1335, %v1338
        %v1340 = vrot.slane %v1330, 4
        %v1341 = vsel %vm711, %v1340, %v1328
        %v1343 = vunpack.c.l.s4 1983009808
        %v1344 = vunpack.c.0.s8 %v1343
        %v1345 = vperm.slane %v1341, %v1344
        %v1346 = vsel %vm711, %v1333, %v1322
        %v1348 = vunpack.c.l.s4 1983009808
        %v1349 = vunpack.c.0.s8 %v1348
        %v1350 = vperm.slane %v1346, %v1349
        %v1351 = vrot.slane %v1334, 4
        %v1352 = vsel %vm711, %v1351, %v1332
        %v1354 = vunpack.c.l.s4 1983009808
        %v1355 = vunpack.c.0.s8 %v1354
        %v1356 = vperm.slane %v1352, %v1355
        %v1357 = vrot.slane %v1345, 4
        %v1358 = vsel %vm711, %v1357, %v1339
        %v1359 = vrot.slane %v1339, 4
        %v1360 = vsel %vm711, %v1345, %v1359
        %v1362 = vunpack.c.l.s4 1934713408
        %v1363 = vunpack.c.0.s8 %v1362
        %v1364 = vperm.slane %v1358, %v1363
        %v1366 = vunpack.c.l.s4 1934713408
        %v1367 = vunpack.c.0.s8 %v1366
        %v1368 = vperm.slane %v1360, %v1367
        %v1369 = vrot.slane %v1356, 4
        %v1370 = vsel %vm711, %v1369, %v1350
        %v1371 = vrot.slane %v1350, 4
        %v1372 = vsel %vm711, %v1356, %v1371
        %v1374 = vunpack.c.l.s4 1934713408
        %v1375 = vunpack.c.0.s8 %v1374
        %v1376 = vperm.slane %v1370, %v1375
        %v1378 = vunpack.c.l.s4 1934713408
        %v1379 = vunpack.c.0.s8 %v1378
        %v1380 = vperm.slane %v1372, %v1379
        %v1381 = vrot.slane %v1376, 4
        %v1382 = vsel %vm711, %v1381, %v1364
        %v1383 = vrot.slane %v1364, 4
        %v1384 = vsel %vm711, %v1376, %v1383
        %v1385 = vrot.slane %v1380, 4
        %v1386 = vsel %vm711, %v1385, %v1368
        %v1387 = vrot.slane %v1368, 4
        %v1388 = vsel %vm711, %v1380, %v1387
        %1390 = vrot.lane.b32.xlu0 %v1384, 8
        %v1391 = vpop.permute.xlu0 %1390
        %1394 = vrot.lane.b32.xlu0 %v1386, 16
        %v1395 = vpop.permute.xlu0 %1394
        %1398 = vrot.lane.b32.xlu0 %v1388, 24
        %v1399 = vpop.permute.xlu0 %1398
        %v1401 = vsel %vm1073, %v1382, %v1391
        %vm1402 = vcmask 130048
        %v1403 = vsel %vm1402, %v1401, %v1395
        %vm1404 = vcmask 195584
        %v1405 = vsel %vm1404, %v1403, %v1399
        %v1406 = vpack.c.bf16 %v1405, %v1405
        %v1407 = vld [vmem:[#allocation5] sm:$0xf]
        %v1408 = vld [vmem:[#allocation5 + $0x4] sm:$0xf]
        %v1409 = vld [vmem:[#allocation5 + $0x8] sm:$0xf]
        %v1410 = vld [vmem:[#allocation5 + $0xc] sm:$0xf]
        %v1411 = vld [vmem:[%s8] sm:$0x1]
        %v1413 = vperm.slane %v1411, 0
        %v1419 = vunpack.c.l.b16 %v1407
        %v1420 = vunpack.c.l.b16 %v1408
        %v1421 = vunpack.c.l.b16 %v1409
        %v1422 = vunpack.c.l.b16 %v1410
        %v1423 = vpack.c.b16 %v1420, %v1419
        %v1424 = vpack.c.b16 %v1422, %v1421
        %v1428 = vsel %vm617, %v1406, 0
        %1430 = vmatpush.bf16.msra.mxu0 0
        %1431 = vmatpush.bf16.msra.mxu0 0
        %1432 = vmatpush.bf16.msra.mxu0 0
        %1433 = vmatpush.bf16.msra.mxu0 0
        %1434 = vmatpush.bf16.msra.mxu0 0
        %1435 = vmatpush.bf16.msra.mxu0 0
        %1436 = vmatpush.bf16.msra.mxu0 %v1424
        %1437 = vmatpush.bf16.msra.mxu0 %v1423
        %1438 = vmatmul.bf16.gmra.mxu0 %v1428
        %v1439 = vpop.f32.mrf.mxu0
        %v1440 = vadd.f32 %v1413, %v1439
        %v1441 = vpop.f32.mrf.mxu0
        %1442 = vdwg.mxu0
        %v1443 = vadd.f32 %v1440, %v595
        %v1444 = vsel %vm617, %v1443, 0.0
        %1445 = vadd.xlane.f32.xlu0 %v1444
        %v1446 = vpop.xlane.xlu0 %1445
        %v1447 = vrcp.pop 32.0
        %v1448 = vmul.f32 32.0, %v1447
        %v1449 = vsub.f32 1.0, %v1448
        %v1450 = vmul.f32 %v1447, %v1449
        %v1451 = vadd.f32 %v1447, %v1450
        %vm1452 = vweird.f32 %v1447
        %v1453 = vsel %vm1452, %v1447, %v1451
        %v1454 = vmul.f32 %v1446, %v1453
        %v1455 = vsub.f32 %v1443, %v1454
        %v1456 = vmul.f32 %v1455, %v1455
        %v1457 = vsel %vm617, %v1456, 0.0
        %1458 = vadd.xlane.f32.xlu0 %v1457
        %v1459 = vpop.xlane.xlu0 %1458
        %v1460 = vmul.f32 %v1459, %v1453
        %v1461 = vadd.f32 %v1460, 1e-05
        %v1462 = vrsqrt.pop %v1461
        %v1463 = vmul.f32 %v1462, %v1461
        %v1464 = vmul.f32 %v1463, %v1462
        %v1465 = vmul.f32 0.5, %v1464
        %v1466 = vsub.f32 1.5, %v1465
        %v1467 = vmul.f32 %v1462, %v1466
        %vm1468 = vweird.f32 %v1461
        %vm1469 = vweird.f32 %v1462
        %vm1470 = vmor %vm1468, %vm1469
        %v1471 = vsel %vm1470, %v1462, %v1467
        %v1472 = vmul.f32 %v1455, %v1471
        %v1473 = vld [vmem:[%s9] sm:$0x1]
        %v1475 = vperm.slane %v1473, 0
        %v1477 = vmul.f32 %v1472, %v1475
        %v1478 = vld [vmem:[%s10] sm:$0x1]
        %v1480 = vperm.slane %v1478, 0
        %v1482 = vadd.f32 %v1477, %v1480
        %v1483 = vpack.c.bf16 %v1482, %v1482
        %v1484 = vld [vmem:[#allocation7] sm:$0xf]
        %v1485 = vld [vmem:[#allocation7 + $0x4] sm:$0xf]
        %v1486 = vld [vmem:[#allocation7 + $0x8] sm:$0xf]
        %v1487 = vld [vmem:[#allocation7 + $0xc] sm:$0xf]
        %v1488 = vld [vmem:[%s12] sm:$0x1]
        %v1490 = vperm.slane %v1488, 0
        %v1496 = vunpack.c.l.b16 %v1484
        %v1497 = vunpack.c.l.b16 %v1485
        %v1498 = vunpack.c.l.b16 %v1486
        %v1499 = vunpack.c.l.b16 %v1487
        %v1500 = vpack.c.b16 %v1497, %v1496
        %v1501 = vpack.c.b16 %v1499, %v1498
        %v1505 = vsel %vm617, %v1483, 0
        %1507 = vmatpush.bf16.msra.mxu0 0
        %1508 = vmatpush.bf16.msra.mxu0 0
        %1509 = vmatpush.bf16.msra.mxu0 0
        %1510 = vmatpush.bf16.msra.mxu0 0
        %1511 = vmatpush.bf16.msra.mxu0 0
        %1512 = vmatpush.bf16.msra.mxu0 0
        %1513 = vmatpush.bf16.msra.mxu0 %v1501
        %1514 = vmatpush.bf16.msra.mxu0 %v1500
        %1515 = vmatmul.bf16.gmra.mxu0 %v1505
        %v1516 = vpop.f32.mrf.mxu0
        %v1517 = vadd.f32 %v1490, %v1516
        %v1518 = vpop.f32.mrf.mxu0
        %1519 = vdwg.mxu0
        %v1520 = vmax.f32 %v1517, 0.0
        %v1521 = vpack.c.bf16 %v1520, %v1520
        %v1522 = vld [vmem:[%s13] sm:$0xf]
        %v1523 = vld [vmem:[%s13 + $0x4] sm:$0xf]
        %v1524 = vld [vmem:[%s13 + $0x8] sm:$0xf]
        %v1525 = vld [vmem:[%s13 + $0xc] sm:$0xf]
        %v1526 = vld [vmem:[%s13 + $0x10] sm:$0xf]
        %v1527 = vld [vmem:[%s13 + $0x14] sm:$0xf]
        %v1528 = vld [vmem:[%s13 + $0x18] sm:$0xf]
        %v1529 = vld [vmem:[%s13 + $0x1c] sm:$0xf]
        %v1530 = vld [vmem:[%s14] sm:$0x1]
        %v1532 = vperm.slane %v1530, 0
        %v1542 = vunpack.c.l.b16 %v1522
        %v1543 = vunpack.c.l.b16 %v1523
        %v1544 = vunpack.c.l.b16 %v1524
        %v1545 = vunpack.c.l.b16 %v1525
        %v1546 = vunpack.c.l.b16 %v1526
        %v1547 = vunpack.c.l.b16 %v1527
        %v1548 = vunpack.c.l.b16 %v1528
        %v1549 = vunpack.c.l.b16 %v1529
        %v1550 = vpack.c.b16 %v1543, %v1542
        %v1551 = vpack.c.b16 %v1545, %v1544
        %v1552 = vpack.c.b16 %v1547, %v1546
        %v1553 = vpack.c.b16 %v1549, %v1548
        %vm1558 = vcmask 523264
        %v1560 = vsel %vm1558, %v1521, 0
        %1562 = vmatpush.bf16.msra.mxu0 0
        %1563 = vmatpush.bf16.msra.mxu0 0
        %1564 = vmatpush.bf16.msra.mxu0 0
        %1565 = vmatpush.bf16.msra.mxu0 0
        %1566 = vmatpush.bf16.msra.mxu0 %v1553
        %1567 = vmatpush.bf16.msra.mxu0 %v1552
        %1568 = vmatpush.bf16.msra.mxu0 %v1551
        %1569 = vmatpush.bf16.msra.mxu0 %v1550
        %1570 = vmatmul.bf16.gmra.mxu0 %v1560
        %v1571 = vpop.f32.mrf.mxu0
        %v1572 = vadd.f32 %v1532, %v1571
        %v1573 = vpop.f32.mrf.mxu0
        %1574 = vdwg.mxu0
        %v1575 = vadd.f32 %v1572, %v1482
        %v1576 = vsel %vm617, %v1575, 0.0
        %1577 = vadd.xlane.f32.xlu0 %v1576
        %v1578 = vpop.xlane.xlu0 %1577
        %v1579 = vmul.f32 %v1578, %v1453
        %v1580 = vsub.f32 %v1575, %v1579
        %v1581 = vmul.f32 %v1580, %v1580
        %v1582 = vsel %vm617, %v1581, 0.0
        %1583 = vadd.xlane.f32.xlu0 %v1582
        %v1584 = vpop.xlane.xlu0 %1583
        %v1585 = vmul.f32 %v1584, %v1453
        %v1586 = vadd.f32 %v1585, 1e-05
        %v1587 = vrsqrt.pop %v1586
        %v1588 = vmul.f32 %v1587, %v1586
        %v1589 = vmul.f32 %v1588, %v1587
        %v1590 = vmul.f32 0.5, %v1589
        %v1591 = vsub.f32 1.5, %v1590
        %v1592 = vmul.f32 %v1587, %v1591
        %vm1593 = vweird.f32 %v1586
        %vm1594 = vweird.f32 %v1587
        %vm1595 = vmor %vm1593, %vm1594
        %v1596 = vsel %vm1595, %v1587, %v1592
        %v1597 = vmul.f32 %v1580, %v1596
        %v1598 = vld [vmem:[%s15] sm:$0x1]
        %v1600 = vperm.slane %v1598, 0
        %v1602 = vmul.f32 %v1597, %v1600
        %v1603 = vld [vmem:[%s16] sm:$0x1]
        %v1605 = vperm.slane %v1603, 0
        %v1607 = vadd.f32 %v1602, %v1605
        %1608 = vst.msk [vmem:[%s589] sm:$0xff] %vm617, %v1607
        %s1609 = sand.u32 %s403, 1
        %s1610 = scalar_lea.sflag [#allocation4], %s1609
        %s1611 = sand.u32 %s403, 1
        %s1612 = smul.addr %s1611, 8
        %s1613 = scalar_lea.vmem [#allocation8], %s1612
        // Predicated region
        $region101: #{tpu_custom_call.1} parent=87 // pred_check
          %p1614 = pneg %p413
        $region102: #{tpu_custom_call.1} parent=87 // pred_check_branch
          %1616 = sbr.rel (%p1614) target = $region104
        $region103: #{tpu_custom_call.1} parent=87 // pred_region
          %1618 = vsyncadd %s1610, 0
          %s1619 = smul.addr %s33, 8
          %s1620 = scalar_lea.hbm %s17, %s1619
          %s1622 = sshll.u32 %s1613, 4
          %s1623 = int_to_ptr.vmem [resolvable:$true] %s1622
          %s1624 = sshll.u32 %s1620, 4
          %s1625 = int_to_ptr.hbm [resolvable:$true] %s1624
          %1627 = dma.vmem_to_hbm [thread:$0]  %s1623, 128, %s1625, %s1610
        $region104: #{tpu_custom_call.1} parent=87 // pred_fallthru
          _
      $region88: #{tpu_custom_call.1} parent=5 // pred_fallthru
        _
      %p1628 = scmp.le.s32.totalorder 2, %s28
      // Predicated region
      $region105: #{tpu_custom_call.1} parent=5 // pred_check
        %p1629 = pneg %p1628
      $region106: #{tpu_custom_call.1} parent=5 // pred_check_branch
        %1631 = sbr.rel (%p1629) target = $region108
      $region107: #{tpu_custom_call.1} parent=5 // pred_region
        %s1632 = ssub.s32 %s28, 2
        // Predicated region
        $region109: #{tpu_custom_call.1} parent=107 // pred_check
          %p1633 = pneg %p419
        $region110: #{tpu_custom_call.1} parent=107 // pred_check_branch
          %1635 = sbr.rel (%p1633) target = $region112
        $region111: #{tpu_custom_call.1} parent=107 // pred_region
          %s1636 = sand.u32 %s404, 1
          %s1637 = scalar_lea.sflag [#allocation4], %s1636
          %s1638 = sand.u32 %s404, 1
          %s1639 = smul.addr %s1638, 8
          %s1640 = scalar_lea.vmem [#allocation8], %s1639
          %1642 = dma.done %s1637, 128
        $region112: #{tpu_custom_call.1} parent=107 // pred_fallthru
          _
      $region108: #{tpu_custom_call.1} parent=5 // pred_fallthru
        _
    $region6: #{tpu_custom_call.1} parent=1 // loop_footer
      %s32 = sadd.s32 1, %s28
    $region7: #{tpu_custom_call.1} parent=1 // loop_footer_branch
      %27 = sbr.rel target = $region3
    $region8: #{tpu_custom_call.1} parent=1 // loop_exit
      _
    %1643 = vsyncpa [#allocation3], 1
    %s1644 = scalar_lea.sflag [#allocation3], 1
    %1645 = vsyncpa %s1644, 1
    %1646 = vsyncpa [#allocation6], 1
    %1647 = vsyncpa [#allocation4], 1
    %s1648 = scalar_lea.sflag [#allocation4], 1
    %1649 = vsyncpa %s1648, 1

</llo_original>
